<compile_context>
chip_gen: v7x
topology: tpu7x:2x2x1
jax: 0.10.0
libtpu: 0.0.40
codegen_flags: <defaults>
</compile_context>

<pallas_src>
import numpy as np

import jax
import jax.numpy as jnp
from jax.experimental import pallas as pl
from jax.experimental.pallas import tpu as pltpu


def _round_up(x, m):
    return ((x + m - 1) // m) * m


# ----------------------------------------------------------------------------
# Pallas kernel: one batch tile, all ensemble heads fused.
# ----------------------------------------------------------------------------
def _critic_kernel(x_ref, w1_ref, b1_ref, w2_ref, b2_ref, w3_ref, b3_ref,
                   o_ref):
    # x_ref : [TB, Dp]     bf16  batch tile of concat(encoder(ob), flatten(ac))
    # w1_ref: [Dp, E*Hp]   bf16  layer-1 weights, all heads concatenated on N
    # b1_ref: [1, E*Hp]    f32
    # w2_ref: [E, Hp, Hp]  bf16   b2_ref: [E, Hp] f32
    # w3_ref: [E, Hp]      bf16   b3_ref: [E]     f32  (SMEM scalars)
    # o_ref : [E, TB]      f32   lane-dense Q-values (batch on the lane axis)
    x = x_ref[...]                                    # keep bf16 for MXU path
    E, Hp, _ = w2_ref.shape

    # Layer 1, fused across heads: ONE [TB,Dp] @ [Dp,E*Hp] MXU matmul
    # (f32 accumulation), bias + ReLU on the VPU.
    h1_all = jnp.dot(x, w1_ref[...], preferred_element_type=jnp.float32)
    h1_all = jnp.maximum(h1_all + b1_ref[...], 0.0).astype(x.dtype)

    qs = []
    for e in range(E):                                # E is small: unrolled
        h1 = h1_all[:, e * Hp:(e + 1) * Hp]           # static lane slice (x128)
        # Layer 2 (per head).
        h2 = jnp.dot(h1, w2_ref[e], preferred_element_type=jnp.float32)
        h2 = jnp.maximum(h2 + b2_ref[e:e + 1, :], 0.0)
        # Layer 3 (output width 1): VPU multiply + lane reduction instead of a
        # degenerate N=1 MXU matmul.
        w3 = w3_ref[e:e + 1, :].astype(jnp.float32)   # [1, Hp]
        qs.append(jnp.sum(h2 * w3, axis=-1) + b3_ref[e])   # [TB]
    # Single stacked, lane-dense store for all heads of this batch tile.
    o_ref[...] = jnp.stack(qs, axis=0).astype(o_ref.dtype)


def critic_ensemble_forward(x, params):
    """Run the critic ensemble on x = concat(encoder(ob), flatten_ac(ac)).

    x:      [B, D]  float32
    params: padded / stacked ensemble weights:
            w1 [Dp, E*Hp] bf16, b1 [1, E*Hp] f32,
            w2 [E, Hp, Hp] bf16, b2 [E, Hp]  f32,
            w3 [E, Hp]     bf16, b3 [E]      f32
    returns: [E, B] float32 (one row of Q-values per ensemble head)
    """
    w1, b1 = params["w1"], params["b1"]
    w2, b2 = params["w2"], params["b2"]
    w3, b3 = params["w3"], params["b3"]

    E, Hp, _ = w2.shape
    Dp = w1.shape[0]
    B, D = x.shape
    assert D <= Dp

    # Batch-tile selection: always >= 2 parallel grid blocks (v7x has 2 TCs),
    # TB always a multiple of 128 (lane-dense, unmasked [E, TB] output block),
    # larger tiles for big batches to amortize per-grid-step overhead.
    if B <= 1024:
        TB = max(128, _round_up(pl.cdiv(B, 2), 128))
    elif B <= 4096:
        TB = 512
    else:
        TB = 1024
    num_tiles = max(2, pl.cdiv(B, TB))
    Bp = num_tiles * TB

    # Fused cast + feature-pad + batch-row-pad of the concat result (no
    # separate full [Bp, Dp] zeros + scatter pass).
    x_p = x.astype(jnp.bfloat16)
    if D < Dp:
        x_p = jnp.concatenate(
            [x_p, jnp.zeros((B, Dp - D), jnp.bfloat16)], axis=-1)
    if Bp > B:
        x_p = jnp.pad(x_p, ((0, Bp - B), (0, 0)))

    # Explicit VMEM budget (weights single-buffered when Buffered(1) is
    # honored; use the 2x double-buffered figure as the safe upper bound).
    weight_bytes = (w1.size + w2.size + w3.size) * 2 + (b1.size + b2.size) * 4
    act_bytes = 2 * (TB * Dp * 2 + E * TB * 4)          # x / out tiles (x2 buf)
    interm_bytes = TB * E * Hp * 4 + 2 * TB * Hp * 4    # h1_all + per-head h2
    vmem_limit = int(min(64 * 2**20,
                         max(16 * 2**20,
                             2 * weight_bytes + act_bytes + interm_bytes
                             + 4 * 2**20)))

    def build(single_buffer_weights):
        wkw = ({"pipeline_mode": pl.Buffered(1)}
               if single_buffer_weights else {})
        grid_spec = pltpu.PrefetchScalarGridSpec(
            num_scalar_prefetch=0,
            grid=(num_tiles,),
            in_specs=[
                pl.BlockSpec((TB, Dp), lambda i: (i, 0)),             # x tile
                pl.BlockSpec((Dp, E * Hp), lambda i: (0, 0), **wkw),  # w1 cat
                pl.BlockSpec((1, E * Hp), lambda i: (0, 0), **wkw),   # b1 cat
                pl.BlockSpec((E, Hp, Hp), lambda i: (0, 0, 0), **wkw),  # w2
                pl.BlockSpec((E, Hp), lambda i: (0, 0), **wkw),       # b2
                pl.BlockSpec((E, Hp), lambda i: (0, 0), **wkw),       # w3 cols
                pl.BlockSpec(memory_space=pltpu.MemorySpace.SMEM),    # b3
            ],
            out_specs=pl.BlockSpec((E, TB), lambda i: (0, i)),
        )
        return pl.pallas_call(
            _critic_kernel,
            out_shape=jax.ShapeDtypeStruct((E, Bp), jnp.float32),
            grid_spec=grid_spec,
            compiler_params=pltpu.CompilerParams(
                dimension_semantics=("parallel",),
                vmem_limit_bytes=vmem_limit),
        )

    args = (x_p, w1, b1, w2, b2, w3, b3)
    try:
        out = build(True)(*args)
    except Exception:
        # pipeline_mode=pl.Buffered(1) (single-buffered grid-invariant weight
        # blocks) may be unsupported by the installed Mosaic build; fall back
        # to the default double-buffered specs.
        out = build(False)(*args)

    return out[:, :B]


# ----------------------------------------------------------------------------
# Critic wrapper (glue in plain JAX: flatten / concat / parameter init+pad).
# ----------------------------------------------------------------------------
class CriticPallas:
    def __init__(self, key, ob_dim, ac_dim, hidden_dim, ensemble):
        self.ob_dim = ob_dim
        self.ac_dim = ac_dim
        self.hidden_dim = hidden_dim
        self.ensemble = ensemble

        D = ob_dim + (ac_dim if ac_dim is not None else 0)
        self.input_dim = D
        Dp = _round_up(D, 128)
        Hp = _round_up(hidden_dim, 128)
        self.Dp, self.Hp = Dp, Hp

        def _uniform(k, fan_in, shape):
            bound = 1.0 / np.sqrt(fan_in)
            return jax.random.uniform(k, shape, jnp.float32, -bound, bound)

        ks = jax.random.split(key, 6)
        E, H = ensemble, hidden_dim

        # Unpadded f32 master parameters (reference / checkpoint layout).
        w1 = _uniform(ks[0], D, (E, D, H))
        b1 = _uniform(ks[1], D, (E, H))
        w2 = _uniform(ks[2], H, (E, H, H))
        b2 = _uniform(ks[3], H, (E, H))
        w3 = _uniform(ks[4], H, (E, H, 1))
        b3 = _uniform(ks[5], H, (E, 1))
        # Make weight matrices exactly bf16-representable so the bf16 kernel
        # and the f32 reference share the same weight values.
        w1 = w1.astype(jnp.bfloat16).astype(jnp.float32)
        w2 = w2.astype(jnp.bfloat16).astype(jnp.float32)
        w3 = w3.astype(jnp.bfloat16).astype(jnp.float32)
        self.ref_params = {"w1": w1, "b1": b1, "w2": w2, "b2": b2,
                           "w3": w3, "b3": b3}

        # Padded, kernel-layout parameters (weights bf16, biases f32).
        def _pad(a, shape):
            out = jnp.zeros(shape, a.dtype)
            return out.at[tuple(slice(0, s) for s in a.shape)].set(a)

        w1_pad = _pad(w1, (E, Dp, Hp))                              # [E,Dp,Hp]
        w1_cat = jnp.transpose(w1_pad, (1, 0, 2)).reshape(Dp, E * Hp)
        b1_cat = _pad(b1, (E, Hp)).reshape(1, E * Hp)
        self.params = {
            "w1": w1_cat.astype(jnp.bfloat16),                      # [Dp,E*Hp]
            "b1": b1_cat,                                           # [1, E*Hp]
            "w2": _pad(w2, (E, Hp, Hp)).astype(jnp.bfloat16),
            "b2": _pad(b2, (E, Hp)),
            "w3": _pad(w3[..., 0], (E, Hp)).astype(jnp.bfloat16),
            "b3": b3[:, 0],
        }

    def encoder(self, ob):
        # State-observation encoder: flatten to [B, ob_dim].
        return ob.reshape(ob.shape[0], -1).astype(jnp.float32)

    def __call__(self, ob, ac=None, detach_conv=False):
        # TODO(synk): detach_conv is a no-op in this functional JAX port.
        out = self.encoder(ob)
        if ac is not None:
            ac_flat = ac.reshape(ac.shape[0], -1).astype(jnp.float32)
            out = jnp.concatenate([out, ac_flat], axis=-1)
        assert out.ndim == 2
        q = critic_ensemble_forward(out, self.params)          # [E, B]
        outs = [q[e][:, None] for e in range(self.ensemble)]   # list of [B,1]
        if len(outs) == 1:
            return outs[0]
        return outs


# Pure-JAX reference (f32) for verification.
def _reference(x, params):
    def one(w1, b1, w2, b2, w3, b3):
        h1 = jnp.maximum(x @ w1 + b1, 0.0)
        h2 = jnp.maximum(h1 @ w2 + b2, 0.0)
        return h2 @ w3 + b3
    return jax.vmap(one)(params["w1"], params["b1"], params["w2"],
                         params["b2"], params["w3"], params["b3"])


if __name__ == "__main__":
    key = jax.random.PRNGKey(0)
    k_param, k_ob, k_ac = jax.random.split(key, 3)

    # Small shapes: batch=2, ob_dim=16, ac_dim=4, hidden=32, ensemble=2.
    B, OB, AC, H, E = 2, 16, 4, 32, 2
    critic = CriticPallas(k_param, ob_dim=OB, ac_dim=AC,
                          hidden_dim=H, ensemble=E)

    ob = jax.random.normal(k_ob, (B, OB), jnp.float32)
    ac = jax.random.normal(k_ac, (B, AC), jnp.float32)

    qs = critic(ob, ac)                     # list of [B, 1], one per head
    qs = [jax.block_until_ready(q) for q in qs]

    # Correctness check against a pure-JAX f32 reference (bf16 activations in
    # the kernel introduce ~1e-3 level differences; covered by the tolerance).
    x = jnp.concatenate([ob, ac], axis=-1)
    ref = _reference(x, critic.ref_params)  # [E, B, 1]
    for e in range(E):
        np.testing.assert_allclose(np.asarray(qs[e]), np.asarray(ref[e]),
                                   rtol=2e-2, atol=2e-2)

    # Second sanity check: ragged, multi-tile batch path.
    B2 = 300
    ob2 = jax.random.normal(jax.random.PRNGKey(1), (B2, OB), jnp.float32)
    ac2 = jax.random.normal(jax.random.PRNGKey(2), (B2, AC), jnp.float32)
    qs2 = critic(ob2, ac2)
    qs2 = [jax.block_until_ready(q) for q in qs2]
    x2 = jnp.concatenate([ob2, ac2], axis=-1)
    ref2 = _reference(x2, critic.ref_params)
    for e in range(E):
        np.testing.assert_allclose(np.asarray(qs2[e]), np.asarray(ref2[e]),
                                   rtol=2e-2, atol=2e-2)

    print("KERNEL_OK")
</pallas_src>

<mosaic_0001>
module attributes {stable_mosaic.version = 11 : i64} {
  func.func @_critic_kernel(%arg0: i32, %arg1: memref<128x128xbf16, #tpu.memory_space<vmem>>, %arg2: memref<128x256xbf16, #tpu.memory_space<vmem>>, %arg3: memref<1x256xf32, #tpu.memory_space<vmem>>, %arg4: memref<2x128x128xbf16, #tpu.memory_space<vmem>>, %arg5: memref<2x128xf32, #tpu.memory_space<vmem>>, %arg6: memref<2x128xbf16, #tpu.memory_space<vmem>>, %arg7: memref<2xf32, #tpu.memory_space<smem>>, %arg8: memref<2x128xf32, #tpu.memory_space<vmem>>) attributes {dimension_semantics = [#tpu.dimension_semantics<parallel>], iteration_bounds = array<i64: 2>, scalar_prefetch = 0 : i64, scratch_operands = 0 : i64, tpu.core_type = #tpu.core_type<tc>, window_params = [{transform_indices = @transform_0, window_bounds = array<i64: 128, 128>}, {pipeline_mode = #tpu.pipeline_mode<synchronous>, transform_indices = @transform_1, window_bounds = array<i64: 128, 256>}, {pipeline_mode = #tpu.pipeline_mode<synchronous>, transform_indices = @transform_2, window_bounds = array<i64: 1, 256>}, {pipeline_mode = #tpu.pipeline_mode<synchronous>, transform_indices = @transform_3, window_bounds = array<i64: 2, 128, 128>}, {pipeline_mode = #tpu.pipeline_mode<synchronous>, transform_indices = @transform_4, window_bounds = array<i64: 2, 128>}, {pipeline_mode = #tpu.pipeline_mode<synchronous>, transform_indices = @transform_5, window_bounds = array<i64: 2, 128>}, {transform_indices = @transform_6, window_bounds = array<i64: 2>}, {transform_indices = @transform_7, window_bounds = array<i64: 2, 128>}]} {
    %c0 = arith.constant 0 : index
    %c0_0 = arith.constant 0 : index
    %0 = vector.load %arg1[%c0, %c0_0] : memref<128x128xbf16, #tpu.memory_space<vmem>>, vector<128x128xbf16>
    %c0_1 = arith.constant 0 : index
    %c0_2 = arith.constant 0 : index
    %1 = vector.load %arg2[%c0_1, %c0_2] : memref<128x256xbf16, #tpu.memory_space<vmem>>, vector<128x256xbf16>
    %cst = arith.constant dense<0.000000e+00> : vector<128x256xf32>
    %2 = tpu.matmul %0, %1, %cst {dimension_numbers = #tpu.dot_dimension_numbers<[1], [0], [0], [1], [0, 0, 1, 1], [], []>} : vector<128x128xbf16>, vector<128x256xbf16>, vector<128x256xf32> -> vector<128x256xf32>
    %c0_3 = arith.constant 0 : index
    %c0_4 = arith.constant 0 : index
    %3 = vector.load %arg3[%c0_3, %c0_4] : memref<1x256xf32, #tpu.memory_space<vmem>>, vector<1x256xf32>
    %4 = vector.broadcast %3 : vector<1x256xf32> to vector<128x256xf32>
    %5 = arith.addf %2, %4 : vector<128x256xf32>
    %cst_5 = arith.constant 0.000000e+00 : f32
    %6 = vector.broadcast %cst_5 : f32 to vector<128x256xf32>
    %7 = arith.maximumf %5, %6 : vector<128x256xf32>
    %8 = arith.truncf %7 : vector<128x256xf32> to vector<128x256xbf16>
    %9 = vector.extract_strided_slice %8 {offsets = [0, 0], sizes = [128, 128], strides = [1, 1]} : vector<128x256xbf16> to vector<128x128xbf16>
    %c0_6 = arith.constant 0 : index
    %c0_7 = arith.constant 0 : index
    %c0_8 = arith.constant 0 : index
    %10 = vector.load %arg4[%c0_6, %c0_7, %c0_8] : memref<2x128x128xbf16, #tpu.memory_space<vmem>>, vector<1x128x128xbf16>
    %11 = vector.shape_cast %10 : vector<1x128x128xbf16> to vector<128x128xbf16>
    %cst_9 = arith.constant dense<0.000000e+00> : vector<128x128xf32>
    %12 = tpu.matmul %9, %11, %cst_9 {dimension_numbers = #tpu.dot_dimension_numbers<[1], [0], [0], [1], [0, 0, 1, 1], [], []>} : vector<128x128xbf16>, vector<128x128xbf16>, vector<128x128xf32> -> vector<128x128xf32>
    %c0_10 = arith.constant 0 : index
    %c0_11 = arith.constant 0 : index
    %13 = vector.load %arg5[%c0_10, %c0_11] : memref<2x128xf32, #tpu.memory_space<vmem>>, vector<1x128xf32>
    %14 = vector.broadcast %13 : vector<1x128xf32> to vector<128x128xf32>
    %15 = arith.addf %12, %14 : vector<128x128xf32>
    %cst_12 = arith.constant 0.000000e+00 : f32
    %16 = vector.broadcast %cst_12 : f32 to vector<128x128xf32>
    %17 = arith.maximumf %15, %16 : vector<128x128xf32>
    %c0_13 = arith.constant 0 : index
    %c0_14 = arith.constant 0 : index
    %18 = vector.load %arg6[%c0_13, %c0_14] : memref<2x128xbf16, #tpu.memory_space<vmem>>, vector<1x128xbf16>
    %19 = arith.extf %18 : vector<1x128xbf16> to vector<1x128xf32>
    %20 = vector.broadcast %19 : vector<1x128xf32> to vector<128x128xf32>
    %21 = arith.mulf %17, %20 : vector<128x128xf32>
    %cst_15 = arith.constant dense<0.000000e+00> : vector<128xf32>
    %22 = vector.multi_reduction <add>, %21, %cst_15 [1] : vector<128x128xf32> to vector<128xf32>
    %c0_16 = arith.constant 0 : index
    %23 = memref.load %arg7[%c0_16] : memref<2xf32, #tpu.memory_space<smem>>
    %24 = vector.broadcast %23 : f32 to vector<128xf32>
    %25 = arith.addf %22, %24 : vector<128xf32>
    %26 = vector.extract_strided_slice %8 {offsets = [0, 128], sizes = [128, 128], strides = [1, 1]} : vector<128x256xbf16> to vector<128x128xbf16>
    %c1 = arith.constant 1 : index
    %c0_17 = arith.constant 0 : index
    %c0_18 = arith.constant 0 : index
    %27 = vector.load %arg4[%c1, %c0_17, %c0_18] : memref<2x128x128xbf16, #tpu.memory_space<vmem>>, vector<1x128x128xbf16>
    %28 = vector.shape_cast %27 : vector<1x128x128xbf16> to vector<128x128xbf16>
    %cst_19 = arith.constant dense<0.000000e+00> : vector<128x128xf32>
    %29 = tpu.matmul %26, %28, %cst_19 {dimension_numbers = #tpu.dot_dimension_numbers<[1], [0], [0], [1], [0, 0, 1, 1], [], []>} : vector<128x128xbf16>, vector<128x128xbf16>, vector<128x128xf32> -> vector<128x128xf32>
    %c1_20 = arith.constant 1 : index
    %c0_21 = arith.constant 0 : index
    %30 = vector.load %arg5[%c1_20, %c0_21] : memref<2x128xf32, #tpu.memory_space<vmem>>, vector<1x128xf32>
    %31 = vector.broadcast %30 : vector<1x128xf32> to vector<128x128xf32>
    %32 = arith.addf %29, %31 : vector<128x128xf32>
    %cst_22 = arith.constant 0.000000e+00 : f32
    %33 = vector.broadcast %cst_22 : f32 to vector<128x128xf32>
    %34 = arith.maximumf %32, %33 : vector<128x128xf32>
    %c1_23 = arith.constant 1 : index
    %c0_24 = arith.constant 0 : index
    %35 = vector.load %arg6[%c1_23, %c0_24] : memref<2x128xbf16, #tpu.memory_space<vmem>>, vector<1x128xbf16>
    %36 = arith.extf %35 : vector<1x128xbf16> to vector<1x128xf32>
    %37 = vector.broadcast %36 : vector<1x128xf32> to vector<128x128xf32>
    %38 = arith.mulf %34, %37 : vector<128x128xf32>
    %cst_25 = arith.constant dense<0.000000e+00> : vector<128xf32>
    %39 = vector.multi_reduction <add>, %38, %cst_25 [1] : vector<128x128xf32> to vector<128xf32>
    %c1_26 = arith.constant 1 : index
    %40 = memref.load %arg7[%c1_26] : memref<2xf32, #tpu.memory_space<smem>>
    %41 = vector.broadcast %40 : f32 to vector<128xf32>
    %42 = arith.addf %39, %41 : vector<128xf32>
    %43 = vector.shape_cast %25 : vector<128xf32> to vector<1x128xf32>
    %44 = vector.shape_cast %42 : vector<128xf32> to vector<1x128xf32>
    %45 = tpu.concatenate %43, %44 in 0 : vector<1x128xf32>, vector<1x128xf32> -> vector<2x128xf32>
    %c0_27 = arith.constant 0 : index
    %c0_28 = arith.constant 0 : index
    %46 = vector.load %arg8[%c0_27, %c0_28] : memref<2x128xf32, #tpu.memory_space<vmem>>, vector<2x128xf32>
    tpu.vector_store %arg8[%c0_27, %c0_28], %45 {strides = array<i32>} : memref<2x128xf32, #tpu.memory_space<vmem>>, vector<2x128xf32>,
    return
  }
  func.func @transform_0(%arg0: i32) -> (i32, i32) {
    %c0_i32 = arith.constant 0 : i32
    %c0_i32_0 = arith.constant 0 : i32
    return %arg0, %c0_i32 : i32, i32
  }
  func.func @transform_1(%arg0: i32) -> (i32, i32) {
    %c0_i32 = arith.constant 0 : i32
    %c0_i32_0 = arith.constant 0 : i32
    %c0_i32_1 = arith.constant 0 : i32
    return %c0_i32, %c0_i32_0 : i32, i32
  }
  func.func @transform_2(%arg0: i32) -> (i32, i32) {
    %c0_i32 = arith.constant 0 : i32
    %c0_i32_0 = arith.constant 0 : i32
    %c0_i32_1 = arith.constant 0 : i32
    return %c0_i32, %c0_i32_0 : i32, i32
  }
  func.func @transform_3(%arg0: i32) -> (i32, i32, i32) {
    %c0_i32 = arith.constant 0 : i32
    %c0_i32_0 = arith.constant 0 : i32
    %c0_i32_1 = arith.constant 0 : i32
    %c0_i32_2 = arith.constant 0 : i32
    return %c0_i32, %c0_i32_0, %c0_i32_1 : i32, i32, i32
  }
  func.func @transform_4(%arg0: i32) -> (i32, i32) {
    %c0_i32 = arith.constant 0 : i32
    %c0_i32_0 = arith.constant 0 : i32
    %c0_i32_1 = arith.constant 0 : i32
    return %c0_i32, %c0_i32_0 : i32, i32
  }
  func.func @transform_5(%arg0: i32) -> (i32, i32) {
    %c0_i32 = arith.constant 0 : i32
    %c0_i32_0 = arith.constant 0 : i32
    %c0_i32_1 = arith.constant 0 : i32
    return %c0_i32, %c0_i32_0 : i32, i32
  }
  func.func @transform_6(%arg0: i32) -> i32 {
    %c0_i32 = arith.constant 0 : i32
    %c0_i32_0 = arith.constant 0 : i32
    return %c0_i32 : i32
  }
  func.func @transform_7(%arg0: i32) -> (i32, i32) {
    %c0_i32 = arith.constant 0 : i32
    %c0_i32_0 = arith.constant 0 : i32
    return %c0_i32, %arg0 : i32, i32
  }
}

module attributes {stable_mosaic.version = 11 : i64} {
  func.func @_critic_kernel(%arg0: i32, %arg1: memref<128x128xbf16, #tpu.memory_space<vmem>>, %arg2: memref<128x256xbf16, #tpu.memory_space<vmem>>, %arg3: memref<1x256xf32, #tpu.memory_space<vmem>>, %arg4: memref<2x128x128xbf16, #tpu.memory_space<vmem>>, %arg5: memref<2x128xf32, #tpu.memory_space<vmem>>, %arg6: memref<2x128xbf16, #tpu.memory_space<vmem>>, %arg7: memref<2xf32, #tpu.memory_space<smem>>, %arg8: memref<2x128xf32, #tpu.memory_space<vmem>>) attributes {dimension_semantics = [#tpu.dimension_semantics<parallel>], iteration_bounds = array<i64: 2>, scalar_prefetch = 0 : i64, scratch_operands = 0 : i64, tpu.core_type = #tpu.core_type<tc>, window_params = [{transform_indices = @transform_0, window_bounds = array<i64: 128, 128>}, {pipeline_mode = #tpu.pipeline_mode<synchronous>, transform_indices = @transform_1, window_bounds = array<i64: 128, 256>}, {pipeline_mode = #tpu.pipeline_mode<synchronous>, transform_indices = @transform_2, window_bounds = array<i64: 1, 256>}, {pipeline_mode = #tpu.pipeline_mode<synchronous>, transform_indices = @transform_3, window_bounds = array<i64: 2, 128, 128>}, {pipeline_mode = #tpu.pipeline_mode<synchronous>, transform_indices = @transform_4, window_bounds = array<i64: 2, 128>}, {pipeline_mode = #tpu.pipeline_mode<synchronous>, transform_indices = @transform_5, window_bounds = array<i64: 2, 128>}, {transform_indices = @transform_6, window_bounds = array<i64: 2>}, {transform_indices = @transform_7, window_bounds = array<i64: 2, 128>}]} {
    %c0 = arith.constant 0 : index
    %c0_0 = arith.constant 0 : index
    %0 = vector.load %arg1[%c0, %c0_0] : memref<128x128xbf16, #tpu.memory_space<vmem>>, vector<128x128xbf16>
    %c0_1 = arith.constant 0 : index
    %c0_2 = arith.constant 0 : index
    %1 = vector.load %arg2[%c0_1, %c0_2] : memref<128x256xbf16, #tpu.memory_space<vmem>>, vector<128x256xbf16>
    %cst = arith.constant dense<0.000000e+00> : vector<128x256xf32>
    %2 = tpu.matmul %0, %1, %cst {dimension_numbers = #tpu.dot_dimension_numbers<[1], [0], [0], [1], [0, 0, 1, 1], [], []>} : vector<128x128xbf16>, vector<128x256xbf16>, vector<128x256xf32> -> vector<128x256xf32>
    %c0_3 = arith.constant 0 : index
    %c0_4 = arith.constant 0 : index
    %3 = vector.load %arg3[%c0_3, %c0_4] : memref<1x256xf32, #tpu.memory_space<vmem>>, vector<1x256xf32>
    %4 = vector.broadcast %3 : vector<1x256xf32> to vector<128x256xf32>
    %5 = arith.addf %2, %4 : vector<128x256xf32>
    %cst_5 = arith.constant 0.000000e+00 : f32
    %6 = vector.broadcast %cst_5 : f32 to vector<128x256xf32>
    %7 = arith.maximumf %5, %6 : vector<128x256xf32>
    %8 = arith.truncf %7 : vector<128x256xf32> to vector<128x256xbf16>
    %9 = vector.extract_strided_slice %8 {offsets = [0, 0], sizes = [128, 128], strides = [1, 1]} : vector<128x256xbf16> to vector<128x128xbf16>
    %c0_6 = arith.constant 0 : index
    %c0_7 = arith.constant 0 : index
    %c0_8 = arith.constant 0 : index
    %10 = vector.load %arg4[%c0_6, %c0_7, %c0_8] : memref<2x128x128xbf16, #tpu.memory_space<vmem>>, vector<1x128x128xbf16>
    %11 = vector.shape_cast %10 : vector<1x128x128xbf16> to vector<128x128xbf16>
    %cst_9 = arith.constant dense<0.000000e+00> : vector<128x128xf32>
    %12 = tpu.matmul %9, %11, %cst_9 {dimension_numbers = #tpu.dot_dimension_numbers<[1], [0], [0], [1], [0, 0, 1, 1], [], []>} : vector<128x128xbf16>, vector<128x128xbf16>, vector<128x128xf32> -> vector<128x128xf32>
    %c0_10 = arith.constant 0 : index
    %c0_11 = arith.constant 0 : index
    %13 = vector.load %arg5[%c0_10, %c0_11] : memref<2x128xf32, #tpu.memory_space<vmem>>, vector<1x128xf32>
    %14 = vector.broadcast %13 : vector<1x128xf32> to vector<128x128xf32>
    %15 = arith.addf %12, %14 : vector<128x128xf32>
    %cst_12 = arith.constant 0.000000e+00 : f32
    %16 = vector.broadcast %cst_12 : f32 to vector<128x128xf32>
    %17 = arith.maximumf %15, %16 : vector<128x128xf32>
    %c0_13 = arith.constant 0 : index
    %c0_14 = arith.constant 0 : index
    %18 = vector.load %arg6[%c0_13, %c0_14] : memref<2x128xbf16, #tpu.memory_space<vmem>>, vector<1x128xbf16>
    %19 = arith.extf %18 : vector<1x128xbf16> to vector<1x128xf32>
    %20 = vector.broadcast %19 : vector<1x128xf32> to vector<128x128xf32>
    %21 = arith.mulf %17, %20 : vector<128x128xf32>
    %cst_15 = arith.constant dense<0.000000e+00> : vector<128xf32>
    %22 = vector.multi_reduction <add>, %21, %cst_15 [1] : vector<128x128xf32> to vector<128xf32>
    %c0_16 = arith.constant 0 : index
    %23 = memref.load %arg7[%c0_16] : memref<2xf32, #tpu.memory_space<smem>>
    %24 = vector.broadcast %23 : f32 to vector<128xf32>
    %25 = arith.addf %22, %24 : vector<128xf32>
    %26 = vector.extract_strided_slice %8 {offsets = [0, 128], sizes = [128, 128], strides = [1, 1]} : vector<128x256xbf16> to vector<128x128xbf16>
    %c1 = arith.constant 1 : index
    %c0_17 = arith.constant 0 : index
    %c0_18 = arith.constant 0 : index
    %27 = vector.load %arg4[%c1, %c0_17, %c0_18] : memref<2x128x128xbf16, #tpu.memory_space<vmem>>, vector<1x128x128xbf16>
    %28 = vector.shape_cast %27 : vector<1x128x128xbf16> to vector<128x128xbf16>
    %cst_19 = arith.constant dense<0.000000e+00> : vector<128x128xf32>
    %29 = tpu.matmul %26, %28, %cst_19 {dimension_numbers = #tpu.dot_dimension_numbers<[1], [0], [0], [1], [0, 0, 1, 1], [], []>} : vector<128x128xbf16>, vector<128x128xbf16>, vector<128x128xf32> -> vector<128x128xf32>
    %c1_20 = arith.constant 1 : index
    %c0_21 = arith.constant 0 : index
    %30 = vector.load %arg5[%c1_20, %c0_21] : memref<2x128xf32, #tpu.memory_space<vmem>>, vector<1x128xf32>
    %31 = vector.broadcast %30 : vector<1x128xf32> to vector<128x128xf32>
    %32 = arith.addf %29, %31 : vector<128x128xf32>
    %cst_22 = arith.constant 0.000000e+00 : f32
    %33 = vector.broadcast %cst_22 : f32 to vector<128x128xf32>
    %34 = arith.maximumf %32, %33 : vector<128x128xf32>
    %c1_23 = arith.constant 1 : index
    %c0_24 = arith.constant 0 : index
    %35 = vector.load %arg6[%c1_23, %c0_24] : memref<2x128xbf16, #tpu.memory_space<vmem>>, vector<1x128xbf16>
    %36 = arith.extf %35 : vector<1x128xbf16> to vector<1x128xf32>
    %37 = vector.broadcast %36 : vector<1x128xf32> to vector<128x128xf32>
    %38 = arith.mulf %34, %37 : vector<128x128xf32>
    %cst_25 = arith.constant dense<0.000000e+00> : vector<128xf32>
    %39 = vector.multi_reduction <add>, %38, %cst_25 [1] : vector<128x128xf32> to vector<128xf32>
    %c1_26 = arith.constant 1 : index
    %40 = memref.load %arg7[%c1_26] : memref<2xf32, #tpu.memory_space<smem>>
    %41 = vector.broadcast %40 : f32 to vector<128xf32>
    %42 = arith.addf %39, %41 : vector<128xf32>
    %43 = vector.shape_cast %25 : vector<128xf32> to vector<1x128xf32>
    %44 = vector.shape_cast %42 : vector<128xf32> to vector<1x128xf32>
    %45 = tpu.concatenate %43, %44 in 0 : vector<1x128xf32>, vector<1x128xf32> -> vector<2x128xf32>
    %c0_27 = arith.constant 0 : index
    %c0_28 = arith.constant 0 : index
    %46 = vector.load %arg8[%c0_27, %c0_28] : memref<2x128xf32, #tpu.memory_space<vmem>>, vector<2x128xf32>
    tpu.vector_store %arg8[%c0_27, %c0_28], %45 {strides = array<i32>} : memref<2x128xf32, #tpu.memory_space<vmem>>, vector<2x128xf32>,
    return
  }
  func.func @transform_0(%arg0: i32) -> (i32, i32) {
    %c0_i32 = arith.constant 0 : i32
    %c0_i32_0 = arith.constant 0 : i32
    return %arg0, %c0_i32 : i32, i32
  }
  func.func @transform_1(%arg0: i32) -> (i32, i32) {
    %c0_i32 = arith.constant 0 : i32
    %c0_i32_0 = arith.constant 0 : i32
    %c0_i32_1 = arith.constant 0 : i32
    return %c0_i32, %c0_i32_0 : i32, i32
  }
  func.func @transform_2(%arg0: i32) -> (i32, i32) {
    %c0_i32 = arith.constant 0 : i32
    %c0_i32_0 = arith.constant 0 : i32
    %c0_i32_1 = arith.constant 0 : i32
    return %c0_i32, %c0_i32_0 : i32, i32
  }
  func.func @transform_3(%arg0: i32) -> (i32, i32, i32) {
    %c0_i32 = arith.constant 0 : i32
    %c0_i32_0 = arith.constant 0 : i32
    %c0_i32_1 = arith.constant 0 : i32
    %c0_i32_2 = arith.constant 0 : i32
    return %c0_i32, %c0_i32_0, %c0_i32_1 : i32, i32, i32
  }
  func.func @transform_4(%arg0: i32) -> (i32, i32) {
    %c0_i32 = arith.constant 0 : i32
    %c0_i32_0 = arith.constant 0 : i32
    %c0_i32_1 = arith.constant 0 : i32
    return %c0_i32, %c0_i32_0 : i32, i32
  }
  func.func @transform_5(%arg0: i32) -> (i32, i32) {
    %c0_i32 = arith.constant 0 : i32
    %c0_i32_0 = arith.constant 0 : i32
    %c0_i32_1 = arith.constant 0 : i32
    return %c0_i32, %c0_i32_0 : i32, i32
  }
  func.func @transform_6(%arg0: i32) -> i32 {
    %c0_i32 = arith.constant 0 : i32
    %c0_i32_0 = arith.constant 0 : i32
    return %c0_i32 : i32
  }
  func.func @transform_7(%arg0: i32) -> (i32, i32) {
    %c0_i32 = arith.constant 0 : i32
    %c0_i32_0 = arith.constant 0 : i32
    return %c0_i32, %arg0 : i32, i32
  }
}

</mosaic_0001>

<llo_original>
// kernel: tpu_custom_call.1
$region0: #{tpu_custom_call.1}
  #allocation0 [shape = 'u32[]', space=smem, size = 0x4, offset = 0x4, fixed_abs, tag = 'smem constant byte address 0x4 - core index']
  #allocation1 [shape = 'u32[144,128]{1,0:T(1,128)}', space=vmem, size = 0x12000, scoped, tag = 'internal scratch']
  %s0 = inlined_call_operand.hbm [shape: bf16[256,128], index: 0, kind: input, shape index: {}]
  %s1 = inlined_call_operand.hbm [shape: bf16[128,256], index: 1, kind: input, shape index: {}]
  %s2 = inlined_call_operand.vmem [shape: f32[1,256], index: 2, kind: input, shape index: {}]
  %s3 = inlined_call_operand.hbm [shape: bf16[2,128,128], index: 3, kind: input, shape index: {}]
  %s4 = inlined_call_operand.vmem [shape: f32[2,128], index: 4, kind: input, shape index: {}]
  %s5 = inlined_call_operand.vmem [shape: bf16[2,128], index: 5, kind: input, shape index: {}]
  %s6 = inlined_call_operand.vmem [shape: f32[2], index: 6, kind: input, shape index: {}]
  %s7 = inlined_call_operand.hbm [shape: f32[2,256], index: 7, kind: output, shape index: {}]
  %s8 = sld [smem:[#allocation0]]
  $region77: #{tpu_custom_call.1} parent=0
    _
  %s10 = ssub.s32 1, %s8
  %s11 = scalar_select 0, %s10, %s8
  $region1: #{tpu_custom_call.1} parent=0
    #allocation2 [shape = 'u8[65536]{0}', space=vmem, size = 0x10000, scoped, tag = 'input window, operand 0']
    #allocation3 [shape = 's32[2]{0}', space=sflag, size = 0x8, scoped, tag = 'scoped memory for tpu_custom_call.1']
    #allocation4 [shape = 's32[2]{0}', space=sflag, size = 0x8, scoped, tag = 'scoped memory for tpu_custom_call.1']
    #allocation5 [shape = 's32[2]{0}', space=sflag, size = 0x8, scoped, tag = 'scoped memory for tpu_custom_call.1']
    #allocation6 [shape = 'u8[65536]{0}', space=vmem, size = 0x10000, scoped, tag = 'input window, operand 1, single buffered']
    #allocation7 [shape = 's32[1]{0}', space=sflag, size = 0x4, scoped, tag = 'scoped memory for tpu_custom_call.1']
    #allocation8 [shape = 'u8[65536]{0}', space=vmem, size = 0x10000, scoped, tag = 'input window, operand 3, single buffered']
    #allocation9 [shape = 'u8[512]{0}', space=smem, size = 0x200, scoped, tag = 'input window, operand 6, single buffered']
    #allocation10 [shape = 'u8[2048]{0}', space=vmem, size = 0x800, scoped, tag = 'output window, operand 0']
    %12 = vsyncpa [#allocation3], 0
    %s13 = scalar_lea.sflag [#allocation3], 1
    %14 = vsyncpa %s13, 0
    %15 = vsyncpa [#allocation7], 0
    %16 = vsyncpa [#allocation5], 0
    %17 = vsyncpa [#allocation4], 0
    %s18 = scalar_lea.sflag [#allocation4], 1
    %19 = vsyncpa %s18, 0
    loop: start=0, step=1, limit=4
    $region2: #{tpu_custom_call.1} parent=1 // loop_pre_header
      _
    $region3: #{tpu_custom_call.1} parent=1 // loop_header
      %s21 = sphi 0, %s25
      %p22 = scmp.ge.s32.totalorder %s21, 4
      %s31 = sphi 0, %s33
      %s34 = sphi 0, %s31
      %s35 = sphi 0, %s34
      %s51 = sphi 0, %s35
      %s55 = sphi 0, %s55
      %s57 = sphi 0, %s55
      %s58 = sphi 0, %s57
      %s72 = sphi 0, %s58
      %s76 = sphi 0, %s76
      %s78 = sphi 0, %s76
      %s79 = sphi 0, %s78
      %s93 = sphi 0, %s79
      %s97 = sphi 0, %s97
      %s99 = sphi 0, %s97
      %s100 = sphi 0, %s99
      %s114 = sphi 0, %s100
      %s118 = sphi 0, %s118
      %s120 = sphi 0, %s118
      %s121 = sphi 0, %s120
      %s135 = sphi 0, %s121
      %s139 = sphi 0, %s139
      %s141 = sphi 0, %s139
      %s142 = sphi 0, %s141
      %s156 = sphi 0, %s142
      %s160 = sphi 0, %s160
      %s162 = sphi 0, %s160
      %s163 = sphi 0, %s162
      %s177 = sphi 0, %s163
      %s183 = sphi 0, %s185
      %s186 = sphi 0, %s183
      %s187 = sphi 0, %s186
      %s203 = sphi 0, %s187
    $region4: #{tpu_custom_call.1} parent=1 // loop_header_branch
      %24 = sbr.rel (%p22) target = $region8
    $region5: #{tpu_custom_call.1} parent=1 // loop_body
      %s26 = ssub.s32 %s21, 1
      %s27 = ssub.s32 %s21, 2
      %s28 = sadd.s32 %s21, 1
      %s29 = ssub.s32 %s21, %s28
      %p30 = scmp.eq.s32.totalorder %s29, 0
      %s32 = sadd.s32 %s31, 1
      %s33 = scalar_select %p30, %s31, %s32
      %p36 = pneg %p30
      %p37 = scmp.eq.s32.totalorder %s21, 1
      %p38 = por %p36, %p37
      %p39 = scmp.ne.s32.totalorder %s31, %s34
      %p40 = scmp.eq.s32.totalorder %s21, 0
      %p41 = por %p39, %p40
      %p42 = scmp.ne.s32.totalorder %s31, %s34
      %p43 = scmp.eq.s32.totalorder %s26, 1
      %p44 = por %p42, %p43
      %p45 = scmp.ne.s32.totalorder %s34, %s35
      %p46 = scmp.eq.s32.totalorder %s26, 0
      %p47 = por %p45, %p46
      %p48 = scmp.ne.s32.totalorder %s34, %s35
      %p49 = scmp.eq.s32.totalorder %s27, 1
      %p50 = por %p48, %p49
      %p52 = scmp.ne.s32.totalorder %s35, %s51
      %p53 = scmp.eq.s32.totalorder %s27, 0
      %p54 = por %p52, %p53
      %s56 = sadd.s32 %s55, 1
      %p59 = scmp.eq.s32.totalorder %s21, 1
      %p60 = scmp.ne.s32.totalorder %s55, %s57
      %p61 = scmp.eq.s32.totalorder %s21, 0
      %p62 = por %p60, %p61
      %p63 = scmp.ne.s32.totalorder %s55, %s57
      %p64 = scmp.eq.s32.totalorder %s26, 1
      %p65 = por %p63, %p64
      %p66 = scmp.ne.s32.totalorder %s57, %s58
      %p67 = scmp.eq.s32.totalorder %s26, 0
      %p68 = por %p66, %p67
      %p69 = scmp.ne.s32.totalorder %s57, %s58
      %p70 = scmp.eq.s32.totalorder %s27, 1
      %p71 = por %p69, %p70
      %p73 = scmp.ne.s32.totalorder %s58, %s72
      %p74 = scmp.eq.s32.totalorder %s27, 0
      %p75 = por %p73, %p74
      %s77 = sadd.s32 %s76, 1
      %p80 = scmp.eq.s32.totalorder %s21, 1
      %p81 = scmp.ne.s32.totalorder %s76, %s78
      %p82 = scmp.eq.s32.totalorder %s21, 0
      %p83 = por %p81, %p82
      %p84 = scmp.ne.s32.totalorder %s76, %s78
      %p85 = scmp.eq.s32.totalorder %s26, 1
      %p86 = por %p84, %p85
      %p87 = scmp.ne.s32.totalorder %s78, %s79
      %p88 = scmp.eq.s32.totalorder %s26, 0
      %p89 = por %p87, %p88
      %p90 = scmp.ne.s32.totalorder %s78, %s79
      %p91 = scmp.eq.s32.totalorder %s27, 1
      %p92 = por %p90, %p91
      %p94 = scmp.ne.s32.totalorder %s79, %s93
      %p95 = scmp.eq.s32.totalorder %s27, 0
      %p96 = por %p94, %p95
      %s98 = sadd.s32 %s97, 1
      %p101 = scmp.eq.s32.totalorder %s21, 1
      %p102 = scmp.ne.s32.totalorder %s97, %s99
      %p103 = scmp.eq.s32.totalorder %s21, 0
      %p104 = por %p102, %p103
      %p105 = scmp.ne.s32.totalorder %s97, %s99
      %p106 = scmp.eq.s32.totalorder %s26, 1
      %p107 = por %p105, %p106
      %p108 = scmp.ne.s32.totalorder %s99, %s100
      %p109 = scmp.eq.s32.totalorder %s26, 0
      %p110 = por %p108, %p109
      %p111 = scmp.ne.s32.totalorder %s99, %s100
      %p112 = scmp.eq.s32.totalorder %s27, 1
      %p113 = por %p111, %p112
      %p115 = scmp.ne.s32.totalorder %s100, %s114
      %p116 = scmp.eq.s32.totalorder %s27, 0
      %p117 = por %p115, %p116
      %s119 = sadd.s32 %s118, 1
      %p122 = scmp.eq.s32.totalorder %s21, 1
      %p123 = scmp.ne.s32.totalorder %s118, %s120
      %p124 = scmp.eq.s32.totalorder %s21, 0
      %p125 = por %p123, %p124
      %p126 = scmp.ne.s32.totalorder %s118, %s120
      %p127 = scmp.eq.s32.totalorder %s26, 1
      %p128 = por %p126, %p127
      %p129 = scmp.ne.s32.totalorder %s120, %s121
      %p130 = scmp.eq.s32.totalorder %s26, 0
      %p131 = por %p129, %p130
      %p132 = scmp.ne.s32.totalorder %s120, %s121
      %p133 = scmp.eq.s32.totalorder %s27, 1
      %p134 = por %p132, %p133
      %p136 = scmp.ne.s32.totalorder %s121, %s135
      %p137 = scmp.eq.s32.totalorder %s27, 0
      %p138 = por %p136, %p137
      %s140 = sadd.s32 %s139, 1
      %p143 = scmp.eq.s32.totalorder %s21, 1
      %p144 = scmp.ne.s32.totalorder %s139, %s141
      %p145 = scmp.eq.s32.totalorder %s21, 0
      %p146 = por %p144, %p145
      %p147 = scmp.ne.s32.totalorder %s139, %s141
      %p148 = scmp.eq.s32.totalorder %s26, 1
      %p149 = por %p147, %p148
      %p150 = scmp.ne.s32.totalorder %s141, %s142
      %p151 = scmp.eq.s32.totalorder %s26, 0
      %p152 = por %p150, %p151
      %p153 = scmp.ne.s32.totalorder %s141, %s142
      %p154 = scmp.eq.s32.totalorder %s27, 1
      %p155 = por %p153, %p154
      %p157 = scmp.ne.s32.totalorder %s142, %s156
      %p158 = scmp.eq.s32.totalorder %s27, 0
      %p159 = por %p157, %p158
      %s161 = sadd.s32 %s160, 1
      %p164 = scmp.eq.s32.totalorder %s21, 1
      %p165 = scmp.ne.s32.totalorder %s160, %s162
      %p166 = scmp.eq.s32.totalorder %s21, 0
      %p167 = por %p165, %p166
      %p168 = scmp.ne.s32.totalorder %s160, %s162
      %p169 = scmp.eq.s32.totalorder %s26, 1
      %p170 = por %p168, %p169
      %p171 = scmp.ne.s32.totalorder %s162, %s163
      %p172 = scmp.eq.s32.totalorder %s26, 0
      %p173 = por %p171, %p172
      %p174 = scmp.ne.s32.totalorder %s162, %s163
      %p175 = scmp.eq.s32.totalorder %s27, 1
      %p176 = por %p174, %p175
      %p178 = scmp.ne.s32.totalorder %s163, %s177
      %p179 = scmp.eq.s32.totalorder %s27, 0
      %p180 = por %p178, %p179
      %s181 = ssub.s32 %s21, %s28
      %p182 = scmp.eq.s32.totalorder %s181, 0
      %s184 = sadd.s32 %s183, 1
      %s185 = scalar_select %p182, %s183, %s184
      %p188 = pneg %p182
      %p189 = scmp.eq.s32.totalorder %s21, 1
      %p190 = por %p188, %p189
      %p191 = scmp.ne.s32.totalorder %s183, %s186
      %p192 = scmp.eq.s32.totalorder %s21, 0
      %p193 = por %p191, %p192
      %p194 = scmp.ne.s32.totalorder %s183, %s186
      %p195 = scmp.eq.s32.totalorder %s26, 1
      %p196 = por %p194, %p195
      %p197 = scmp.ne.s32.totalorder %s186, %s187
      %p198 = scmp.eq.s32.totalorder %s26, 0
      %p199 = por %p197, %p198
      %p200 = scmp.ne.s32.totalorder %s186, %s187
      %p201 = scmp.eq.s32.totalorder %s27, 1
      %p202 = por %p200, %p201
      %p204 = scmp.ne.s32.totalorder %s187, %s203
      %p205 = scmp.eq.s32.totalorder %s27, 0
      %p206 = por %p204, %p205
      %p207 = scmp.le.s32.totalorder 1, %s21
      %p208 = scmp.lt.s32.totalorder %s21, 3
      %p209 = pnand %p207, %p208
      %p210 = pneg %p209
      // Predicated region
      $region9: #{tpu_custom_call.1} parent=5 // pred_check
        _
      $region10: #{tpu_custom_call.1} parent=5 // pred_check_branch
        %212 = sbr.rel (%p209) target = $region12
      $region11: #{tpu_custom_call.1} parent=5 // pred_region
        %s213 = ssub.s32 %s21, 1
        // Predicated region
        $region13: #{tpu_custom_call.1} parent=11 // pred_check
          %p214 = pneg %p68
        $region14: #{tpu_custom_call.1} parent=11 // pred_check_branch
          %216 = sbr.rel (%p214) target = $region16
        $region15: #{tpu_custom_call.1} parent=11 // pred_region
          %s218 = ssub.s32 2048, 2048
          %219 = vsyncadd [#allocation7], %s218
          %s220 = sshll.u32 [#allocation6], 4
          %s221 = int_to_ptr.vmem [resolvable:$true] %s220
          %226 = dma.hbm_to_vmem [thread:$0]  %s1, 2048, %s221, [#allocation7], 128, 128, 8
        $region16: #{tpu_custom_call.1} parent=11 // pred_fallthru
          _
        // Predicated region
        $region17: #{tpu_custom_call.1} parent=11 // pred_check
          %p227 = pneg %p89
        $region18: #{tpu_custom_call.1} parent=11 // pred_check_branch
          %229 = sbr.rel (%p227) target = $region20
        $region19: #{tpu_custom_call.1} parent=11 // pred_region
          _
        $region20: #{tpu_custom_call.1} parent=11 // pred_fallthru
          _
        // Predicated region
        $region21: #{tpu_custom_call.1} parent=11 // pred_check
          %p230 = pneg %p110
        $region22: #{tpu_custom_call.1} parent=11 // pred_check_branch
          %232 = sbr.rel (%p230) target = $region24
        $region23: #{tpu_custom_call.1} parent=11 // pred_region
          %s234 = ssub.s32 2048, 2048
          %235 = vsyncadd [#allocation7], %s234
          %s236 = sshll.u32 [#allocation8], 4
          %s237 = int_to_ptr.vmem [resolvable:$true] %s236
          %242 = dma.hbm_to_vmem [thread:$0]  %s3, 2048, %s237, [#allocation7], 64, 64, 4
        $region24: #{tpu_custom_call.1} parent=11 // pred_fallthru
          _
        // Predicated region
        $region25: #{tpu_custom_call.1} parent=11 // pred_check
          %p243 = pneg %p131
        $region26: #{tpu_custom_call.1} parent=11 // pred_check_branch
          %245 = sbr.rel (%p243) target = $region28
        $region27: #{tpu_custom_call.1} parent=11 // pred_region
          _
        $region28: #{tpu_custom_call.1} parent=11 // pred_fallthru
          _
        // Predicated region
        $region29: #{tpu_custom_call.1} parent=11 // pred_check
          %p246 = pneg %p152
        $region30: #{tpu_custom_call.1} parent=11 // pred_check_branch
          %248 = sbr.rel (%p246) target = $region32
        $region31: #{tpu_custom_call.1} parent=11 // pred_region
          _
        $region32: #{tpu_custom_call.1} parent=11 // pred_fallthru
          _
        // Predicated region
        $region33: #{tpu_custom_call.1} parent=11 // pred_check
          %p249 = pneg %p173
        $region34: #{tpu_custom_call.1} parent=11 // pred_check_branch
          %251 = sbr.rel (%p249) target = $region36
        $region35: #{tpu_custom_call.1} parent=11 // pred_region
          %s253 = ssub.s32 16, 16
          %254 = vsyncadd [#allocation5], %s253
          %s256 = sshll.u32 %s6, 4
          %s257 = int_to_ptr.vmem [resolvable:$true] %s256
          %259 = dma.vmem_to_smem %s257, 16, [#allocation9], [#allocation5]
        $region36: #{tpu_custom_call.1} parent=11 // pred_fallthru
          _
      $region12: #{tpu_custom_call.1} parent=5 // pred_fallthru
        _
      %p260 = scmp.lt.s32.totalorder %s21, 2
      // Predicated region
      $region37: #{tpu_custom_call.1} parent=5 // pred_check
        %p261 = pneg %p260
      $region38: #{tpu_custom_call.1} parent=5 // pred_check_branch
        %263 = sbr.rel (%p261) target = $region40
      $region39: #{tpu_custom_call.1} parent=5 // pred_region
        // Predicated region
        $region41: #{tpu_custom_call.1} parent=39 // pred_check
          %p264 = pneg %p41
        $region42: #{tpu_custom_call.1} parent=39 // pred_check_branch
          %266 = sbr.rel (%p264) target = $region44
        $region43: #{tpu_custom_call.1} parent=39 // pred_region
          %s267 = sand.u32 %s31, 1
          %s268 = scalar_lea.sflag [#allocation3], %s267
          %s269 = sand.u32 %s31, 1
          %s270 = smul.addr %s269, 64
          %s271 = scalar_lea.vmem [#allocation2], %s270
          %s272 = smul.u32 16, %s21
          %s274 = ssub.s32 1024, 1024
          %275 = vsyncadd %s268, %s274
          %s276 = smul.addr %s272, 64
          %s277 = scalar_lea.hbm %s0, %s276
          %s278 = sshll.u32 %s271, 4
          %s279 = int_to_ptr.vmem [resolvable:$true] %s278
          %284 = dma.hbm_to_vmem [thread:$0]  %s277, 1024, %s279, %s268, 64, 64, 4
        $region44: #{tpu_custom_call.1} parent=39 // pred_fallthru
          _
      $region40: #{tpu_custom_call.1} parent=5 // pred_fallthru
        _
      %p285 = scmp.le.s32.totalorder 1, %s21
      %p286 = scmp.lt.s32.totalorder %s21, 3
      %p287 = pnand %p285, %p286
      %p288 = pneg %p287
      // Predicated region
      $region45: #{tpu_custom_call.1} parent=5 // pred_check
        _
      $region46: #{tpu_custom_call.1} parent=5 // pred_check_branch
        %290 = sbr.rel (%p287) target = $region48
      $region47: #{tpu_custom_call.1} parent=5 // pred_region
        %s291 = ssub.s32 %s21, 1
        %s292 = sand.u32 %s34, 1
        %s293 = scalar_lea.sflag [#allocation3], %s292
        %s294 = sand.u32 %s34, 1
        %s295 = smul.addr %s294, 64
        %s296 = scalar_lea.vmem [#allocation2], %s295
        // Predicated region
        $region49: #{tpu_custom_call.1} parent=47 // pred_check
          %p297 = pneg %p47
        $region50: #{tpu_custom_call.1} parent=47 // pred_check_branch
          %299 = sbr.rel (%p297) target = $region52
        $region51: #{tpu_custom_call.1} parent=47 // pred_region
          %300 = dma.done %s293, 1024
        $region52: #{tpu_custom_call.1} parent=47 // pred_fallthru
          _
        // Predicated region
        $region53: #{tpu_custom_call.1} parent=47 // pred_check
          %p301 = pneg %p68
        $region54: #{tpu_custom_call.1} parent=47 // pred_check_branch
          %303 = sbr.rel (%p301) target = $region56
        $region55: #{tpu_custom_call.1} parent=47 // pred_region
          %304 = dma.done [#allocation7], 2048
        $region56: #{tpu_custom_call.1} parent=47 // pred_fallthru
          _
        // Predicated region
        $region57: #{tpu_custom_call.1} parent=47 // pred_check
          %p305 = pneg %p110
        $region58: #{tpu_custom_call.1} parent=47 // pred_check_branch
          %307 = sbr.rel (%p305) target = $region60
        $region59: #{tpu_custom_call.1} parent=47 // pred_region
          %308 = dma.done [#allocation7], 2048
        $region60: #{tpu_custom_call.1} parent=47 // pred_fallthru
          _
        // Predicated region
        $region61: #{tpu_custom_call.1} parent=47 // pred_check
          %p309 = pneg %p173
        $region62: #{tpu_custom_call.1} parent=47 // pred_check_branch
          %311 = sbr.rel (%p309) target = $region64
        $region63: #{tpu_custom_call.1} parent=47 // pred_region
          %312 = dma.done [#allocation5], 16
        $region64: #{tpu_custom_call.1} parent=47 // pred_fallthru
          _
        %313 = sfence
        %s314 = sand.u32 %s34, 1
        %s315 = scalar_lea.sflag [#allocation3], %s314
        %s316 = sand.u32 %s34, 1
        %s317 = smul.addr %s316, 64
        %s318 = scalar_lea.vmem [#allocation2], %s317
        %p319 = pneg %p47
        %p320 = pneg %p44
        %p321 = pneg %p68
        %p322 = pneg %p65
        %p323 = pneg %p89
        %p324 = pneg %p86
        %p325 = pneg %p110
        %p326 = pneg %p107
        %p327 = pneg %p131
        %p328 = pneg %p128
        %p329 = pneg %p152
        %p330 = pneg %p149
        %p331 = pneg %p173
        %p332 = pneg %p170
        %p333 = pneg %p199
        %p334 = pneg %p196
        %s335 = sand.u32 %s186, 1
        %s336 = scalar_lea.sflag [#allocation4], %s335
        %s337 = sand.u32 %s186, 1
        %s338 = smul.addr %s337, 2
        %s339 = scalar_lea.vmem [#allocation10], %s338
        %s340 = smul.u32 16, %s26
        %v342 = vld [vmem:[%s296] sm:$0xf]
        %v343 = vld [vmem:[%s296 + $0x4] sm:$0xf]
        %v344 = vld [vmem:[%s296 + $0x8] sm:$0xf]
        %v345 = vld [vmem:[%s296 + $0xc] sm:$0xf]
        %v346 = vld [vmem:[%s296 + $0x10] sm:$0xf]
        %v347 = vld [vmem:[%s296 + $0x14] sm:$0xf]
        %v348 = vld [vmem:[%s296 + $0x18] sm:$0xf]
        %v349 = vld [vmem:[%s296 + $0x1c] sm:$0xf]
        %v350 = vld [vmem:[%s296 + $0x20] sm:$0xf]
        %v351 = vld [vmem:[%s296 + $0x24] sm:$0xf]
        %v352 = vld [vmem:[%s296 + $0x28] sm:$0xf]
        %v353 = vld [vmem:[%s296 + $0x2c] sm:$0xf]
        %v354 = vld [vmem:[%s296 + $0x30] sm:$0xf]
        %v355 = vld [vmem:[%s296 + $0x34] sm:$0xf]
        %v356 = vld [vmem:[%s296 + $0x38] sm:$0xf]
        %v357 = vld [vmem:[%s296 + $0x3c] sm:$0xf]
        %v358 = vld [vmem:[#allocation6] sm:$0xff]
        %v359 = vld [vmem:[#allocation6 + $0x8] sm:$0xff]
        %v360 = vld [vmem:[#allocation6 + $0x10] sm:$0xff]
        %v361 = vld [vmem:[#allocation6 + $0x18] sm:$0xff]
        %v362 = vld [vmem:[#allocation6 + $0x20] sm:$0xff]
        %v363 = vld [vmem:[#allocation6 + $0x28] sm:$0xff]
        %v364 = vld [vmem:[#allocation6 + $0x30] sm:$0xff]
        %v365 = vld [vmem:[#allocation6 + $0x38] sm:$0xff]
        %v366 = vld [vmem:[#allocation6 + $0x40] sm:$0xff]
        %v367 = vld [vmem:[#allocation6 + $0x48] sm:$0xff]
        %v368 = vld [vmem:[#allocation6 + $0x50] sm:$0xff]
        %v369 = vld [vmem:[#allocation6 + $0x58] sm:$0xff]
        %v370 = vld [vmem:[#allocation6 + $0x60] sm:$0xff]
        %v371 = vld [vmem:[#allocation6 + $0x68] sm:$0xff]
        %v372 = vld [vmem:[#allocation6 + $0x70] sm:$0xff]
        %v373 = vld [vmem:[#allocation6 + $0x78] sm:$0xff]
        %v374 = vld [vmem:[%s2] sm:$0x3]
        %v376 = vlaneseq
        %v377 = vshrl.u32 %v376, 7
        %v378 = vsub.s32 0, %v377
        %v379 = vrot.slane %v374, %v378
        %v380 = vlaneseq
        %v381 = vshrl.u32 %v380, 7
        %v382 = vsub.s32 1, %v381
        %v383 = vrot.slane %v374, %v382
        %v402 = vunpack.c.l.b16 %v342
        %v403 = vunpack.c.l.b16 %v343
        %v404 = vunpack.c.l.b16 %v344
        %v405 = vunpack.c.l.b16 %v345
        %v406 = vunpack.c.l.b16 %v346
        %v407 = vunpack.c.l.b16 %v347
        %v408 = vunpack.c.l.b16 %v348
        %v409 = vunpack.c.l.b16 %v349
        %v410 = vunpack.c.l.b16 %v350
        %v411 = vunpack.c.l.b16 %v351
        %v412 = vunpack.c.l.b16 %v352
        %v413 = vunpack.c.l.b16 %v353
        %v414 = vunpack.c.l.b16 %v354
        %v415 = vunpack.c.l.b16 %v355
        %v416 = vunpack.c.l.b16 %v356
        %v417 = vunpack.c.l.b16 %v357
        %v418 = vpack.c.b16 %v403, %v402
        %v419 = vpack.c.b16 %v405, %v404
        %v420 = vpack.c.b16 %v407, %v406
        %v421 = vpack.c.b16 %v409, %v408
        %v422 = vpack.c.b16 %v411, %v410
        %v423 = vpack.c.b16 %v413, %v412
        %v424 = vpack.c.b16 %v415, %v414
        %v425 = vpack.c.b16 %v417, %v416
        %v450 = vunpack.c.l.b16 %v358
        %v451 = vunpack.c.h.b16 %v358
        %v452 = vunpack.c.l.b16 %v359
        %v453 = vunpack.c.h.b16 %v359
        %v454 = vunpack.c.l.b16 %v360
        %v455 = vunpack.c.h.b16 %v360
        %v456 = vunpack.c.l.b16 %v361
        %v457 = vunpack.c.h.b16 %v361
        %v458 = vunpack.c.l.b16 %v362
        %v459 = vunpack.c.h.b16 %v362
        %v460 = vunpack.c.l.b16 %v363
        %v461 = vunpack.c.h.b16 %v363
        %v462 = vunpack.c.l.b16 %v364
        %v463 = vunpack.c.h.b16 %v364
        %v464 = vunpack.c.l.b16 %v365
        %v465 = vunpack.c.h.b16 %v365
        %v466 = vunpack.c.l.b16 %v366
        %v467 = vunpack.c.h.b16 %v366
        %v468 = vunpack.c.l.b16 %v367
        %v469 = vunpack.c.h.b16 %v367
        %v470 = vunpack.c.l.b16 %v368
        %v471 = vunpack.c.h.b16 %v368
        %v472 = vunpack.c.l.b16 %v369
        %v473 = vunpack.c.h.b16 %v369
        %v474 = vunpack.c.l.b16 %v370
        %v475 = vunpack.c.h.b16 %v370
        %v476 = vunpack.c.l.b16 %v371
        %v477 = vunpack.c.h.b16 %v371
        %v478 = vunpack.c.l.b16 %v372
        %v479 = vunpack.c.h.b16 %v372
        %v480 = vunpack.c.l.b16 %v373
        %v481 = vunpack.c.h.b16 %v373
        %v482 = vpack.c.b16 %v452, %v450
        %v483 = vpack.c.b16 %v453, %v451
        %v484 = vpack.c.b16 %v456, %v454
        %v485 = vpack.c.b16 %v457, %v455
        %v486 = vpack.c.b16 %v460, %v458
        %v487 = vpack.c.b16 %v461, %v459
        %v488 = vpack.c.b16 %v464, %v462
        %v489 = vpack.c.b16 %v465, %v463
        %v490 = vpack.c.b16 %v468, %v466
        %v491 = vpack.c.b16 %v469, %v467
        %v492 = vpack.c.b16 %v472, %v470
        %v493 = vpack.c.b16 %v473, %v471
        %v494 = vpack.c.b16 %v476, %v474
        %v495 = vpack.c.b16 %v477, %v475
        %v496 = vpack.c.b16 %v480, %v478
        %v497 = vpack.c.b16 %v481, %v479
        %514 = vmatprep.subr.bf16.mxu0 %v483
        %515 = vmatpush1.bf16.msra.mxu0 %v482
        %516 = vmatprep.subr.bf16.mxu0 %v485
        %517 = vmatpush1.bf16.msra.mxu0 %v484
        %518 = vmatprep.subr.bf16.mxu0 %v487
        %519 = vmatpush1.bf16.msra.mxu0 %v486
        %520 = vmatprep.subr.bf16.mxu0 %v489
        %521 = vmatpush1.bf16.msra.mxu0 %v488
        %522 = vmatprep.subr.bf16.mxu0 %v491
        %523 = vmatpush1.bf16.msra.mxu0 %v490
        %524 = vmatprep.subr.bf16.mxu0 %v493
        %525 = vmatpush1.bf16.msra.mxu0 %v492
        %526 = vmatprep.subr.bf16.mxu0 %v495
        %527 = vmatpush1.bf16.msra.mxu0 %v494
        %528 = vmatprep.subr.bf16.mxu0 %v497
        %529 = vmatpush1.bf16.msra.mxu0 %v496
        %530 = vmatprep.subr.bf16.mxu0 0
        %531 = vmatpush1.bf16.msra.mxu0 0
        %532 = vmatprep.subr.bf16.mxu0 0
        %533 = vmatpush1.bf16.msra.mxu0 0
        %534 = vmatprep.subr.bf16.mxu0 0
        %535 = vmatpush1.bf16.msra.mxu0 0
        %536 = vmatprep.subr.bf16.mxu0 0
        %537 = vmatpush1.bf16.msra.mxu0 0
        %538 = vmatprep.subr.bf16.mxu0 0
        %539 = vmatpush1.bf16.msra.mxu0 0
        %540 = vmatprep.subr.bf16.mxu0 0
        %541 = vmatpush1.bf16.msra.mxu0 0
        %542 = vmatprep.subr.bf16.mxu0 0
        %543 = vmatpush1.bf16.msra.mxu0 0
        %544 = vmatprep.subr.bf16.mxu0 0
        %545 = vmatpush1.bf16.msra.mxu0 0
        %546 = vmatprep.mubr.bf16.mxu0 0
        %547 = vmatmul.mubr.bf16.gmra.mrb[0].mxu0 %v418
        %v548 = vpop.f32.mrb[0].mxu0
        %v549 = vadd.f32 %v379, %v548
        %v550 = vpop.f32.mrb[0].mxu0
        %v551 = vadd.f32 %v383, %v550
        %v552 = vpop.f32.mrb[0].mxu0
        %v553 = vadd.f32 %v379, %v552
        %v554 = vpop.f32.mrb[0].mxu0
        %v555 = vadd.f32 %v383, %v554
        %556 = vmatprep.mubr.bf16.mxu0 0
        %557 = vmatmul.mubr.bf16.gmra.mrb[0].mxu0 %v419
        %v558 = vpop.f32.mrb[0].mxu0
        %v559 = vadd.f32 %v379, %v558
        %v560 = vpop.f32.mrb[0].mxu0
        %v561 = vadd.f32 %v383, %v560
        %v562 = vpop.f32.mrb[0].mxu0
        %v563 = vadd.f32 %v379, %v562
        %v564 = vpop.f32.mrb[0].mxu0
        %v565 = vadd.f32 %v383, %v564
        %566 = vmatprep.mubr.bf16.mxu0 0
        %567 = vmatmul.mubr.bf16.gmra.mrb[0].mxu0 %v420
        %v568 = vpop.f32.mrb[0].mxu0
        %v569 = vadd.f32 %v379, %v568
        %v570 = vpop.f32.mrb[0].mxu0
        %v571 = vadd.f32 %v383, %v570
        %v572 = vpop.f32.mrb[0].mxu0
        %v573 = vadd.f32 %v379, %v572
        %v574 = vpop.f32.mrb[0].mxu0
        %v575 = vadd.f32 %v383, %v574
        %576 = vmatprep.mubr.bf16.mxu0 0
        %577 = vmatmul.mubr.bf16.gmra.mrb[0].mxu0 %v421
        %v578 = vpop.f32.mrb[0].mxu0
        %v579 = vadd.f32 %v379, %v578
        %v580 = vpop.f32.mrb[0].mxu0
        %v581 = vadd.f32 %v383, %v580
        %v582 = vpop.f32.mrb[0].mxu0
        %v583 = vadd.f32 %v379, %v582
        %v584 = vpop.f32.mrb[0].mxu0
        %v585 = vadd.f32 %v383, %v584
        %586 = vmatprep.mubr.bf16.mxu0 0
        %587 = vmatmul.mubr.bf16.gmra.mrb[0].mxu0 %v422
        %v588 = vpop.f32.mrb[0].mxu0
        %v589 = vadd.f32 %v379, %v588
        %v590 = vpop.f32.mrb[0].mxu0
        %v591 = vadd.f32 %v383, %v590
        %v592 = vpop.f32.mrb[0].mxu0
        %v593 = vadd.f32 %v379, %v592
        %v594 = vpop.f32.mrb[0].mxu0
        %v595 = vadd.f32 %v383, %v594
        %596 = vmatprep.mubr.bf16.mxu0 0
        %597 = vmatmul.mubr.bf16.gmra.mrb[0].mxu0 %v423
        %v598 = vpop.f32.mrb[0].mxu0
        %v599 = vadd.f32 %v379, %v598
        %v600 = vpop.f32.mrb[0].mxu0
        %v601 = vadd.f32 %v383, %v600
        %v602 = vpop.f32.mrb[0].mxu0
        %v603 = vadd.f32 %v379, %v602
        %v604 = vpop.f32.mrb[0].mxu0
        %v605 = vadd.f32 %v383, %v604
        %606 = vmatprep.mubr.bf16.mxu0 0
        %607 = vmatmul.mubr.bf16.gmra.mrb[0].mxu0 %v424
        %v608 = vpop.f32.mrb[0].mxu0
        %v609 = vadd.f32 %v379, %v608
        %v610 = vpop.f32.mrb[0].mxu0
        %v611 = vadd.f32 %v383, %v610
        %v612 = vpop.f32.mrb[0].mxu0
        %v613 = vadd.f32 %v379, %v612
        %v614 = vpop.f32.mrb[0].mxu0
        %v615 = vadd.f32 %v383, %v614
        %616 = vmatprep.mubr.bf16.mxu0 0
        %617 = vmatmul.mubr.bf16.gmra.mrb[0].mxu0 %v425
        %v618 = vpop.f32.mrb[0].mxu0
        %v619 = vadd.f32 %v379, %v618
        %v620 = vpop.f32.mrb[0].mxu0
        %v621 = vadd.f32 %v383, %v620
        %v622 = vpop.f32.mrb[0].mxu0
        %v623 = vadd.f32 %v379, %v622
        %v624 = vpop.f32.mrb[0].mxu0
        %v625 = vadd.f32 %v383, %v624
        %626 = vdwg.mxu0
        %v627 = vmax.f32 %v549, 0.0
        %v628 = vmax.f32 %v551, 0.0
        %v629 = vmax.f32 %v553, 0.0
        %v630 = vmax.f32 %v555, 0.0
        %v631 = vmax.f32 %v559, 0.0
        %v632 = vmax.f32 %v561, 0.0
        %v633 = vmax.f32 %v563, 0.0
        %v634 = vmax.f32 %v565, 0.0
        %v635 = vmax.f32 %v569, 0.0
        %v636 = vmax.f32 %v571, 0.0
        %v637 = vmax.f32 %v573, 0.0
        %v638 = vmax.f32 %v575, 0.0
        %v639 = vmax.f32 %v579, 0.0
        %v640 = vmax.f32 %v581, 0.0
        %v641 = vmax.f32 %v583, 0.0
        %v642 = vmax.f32 %v585, 0.0
        %v643 = vmax.f32 %v589, 0.0
        %v644 = vmax.f32 %v591, 0.0
        %v645 = vmax.f32 %v593, 0.0
        %v646 = vmax.f32 %v595, 0.0
        %v647 = vmax.f32 %v599, 0.0
        %v648 = vmax.f32 %v601, 0.0
        %v649 = vmax.f32 %v603, 0.0
        %v650 = vmax.f32 %v605, 0.0
        %v651 = vmax.f32 %v609, 0.0
        %v652 = vmax.f32 %v611, 0.0
        %v653 = vmax.f32 %v613, 0.0
        %v654 = vmax.f32 %v615, 0.0
        %v655 = vmax.f32 %v619, 0.0
        %v656 = vmax.f32 %v621, 0.0
        %v657 = vmax.f32 %v623, 0.0
        %v658 = vmax.f32 %v625, 0.0
        %v659 = vpack.c.bf16 %v629, %v627
        %v660 = vpack.c.bf16 %v630, %v628
        %v661 = vpack.c.bf16 %v633, %v631
        %v662 = vpack.c.bf16 %v634, %v632
        %v663 = vpack.c.bf16 %v637, %v635
        %v664 = vpack.c.bf16 %v638, %v636
        %v665 = vpack.c.bf16 %v641, %v639
        %v666 = vpack.c.bf16 %v642, %v640
        %v667 = vpack.c.bf16 %v645, %v643
        %v668 = vpack.c.bf16 %v646, %v644
        %v669 = vpack.c.bf16 %v649, %v647
        %v670 = vpack.c.bf16 %v650, %v648
        %v671 = vpack.c.bf16 %v653, %v651
        %v672 = vpack.c.bf16 %v654, %v652
        %v673 = vpack.c.bf16 %v657, %v655
        %v674 = vpack.c.bf16 %v658, %v656
        %v675 = vld [vmem:[#allocation8] sm:$0xf]
        %v676 = vld [vmem:[#allocation8 + $0x4] sm:$0xf]
        %v677 = vld [vmem:[#allocation8 + $0x8] sm:$0xf]
        %v678 = vld [vmem:[#allocation8 + $0xc] sm:$0xf]
        %v679 = vld [vmem:[#allocation8 + $0x10] sm:$0xf]
        %v680 = vld [vmem:[#allocation8 + $0x14] sm:$0xf]
        %v681 = vld [vmem:[#allocation8 + $0x18] sm:$0xf]
        %v682 = vld [vmem:[#allocation8 + $0x1c] sm:$0xf]
        %v683 = vld [vmem:[#allocation8 + $0x20] sm:$0xf]
        %v684 = vld [vmem:[#allocation8 + $0x24] sm:$0xf]
        %v685 = vld [vmem:[#allocation8 + $0x28] sm:$0xf]
        %v686 = vld [vmem:[#allocation8 + $0x2c] sm:$0xf]
        %v687 = vld [vmem:[#allocation8 + $0x30] sm:$0xf]
        %v688 = vld [vmem:[#allocation8 + $0x34] sm:$0xf]
        %v689 = vld [vmem:[#allocation8 + $0x38] sm:$0xf]
        %v690 = vld [vmem:[#allocation8 + $0x3c] sm:$0xf]
        %v691 = vld [vmem:[%s4] sm:$0x1]
        %v692 = vlaneseq
        %v693 = vshrl.u32 %v692, 7
        %v694 = vsub.s32 0, %v693
        %v695 = vrot.slane %v691, %v694
        %v712 = vunpack.c.l.b16 %v675
        %v713 = vunpack.c.l.b16 %v676
        %v714 = vunpack.c.l.b16 %v677
        %v715 = vunpack.c.l.b16 %v678
        %v716 = vunpack.c.l.b16 %v679
        %v717 = vunpack.c.l.b16 %v680
        %v718 = vunpack.c.l.b16 %v681
        %v719 = vunpack.c.l.b16 %v682
        %v720 = vunpack.c.l.b16 %v683
        %v721 = vunpack.c.l.b16 %v684
        %v722 = vunpack.c.l.b16 %v685
        %v723 = vunpack.c.l.b16 %v686
        %v724 = vunpack.c.l.b16 %v687
        %v725 = vunpack.c.l.b16 %v688
        %v726 = vunpack.c.l.b16 %v689
        %v727 = vunpack.c.l.b16 %v690
        %v728 = vpack.c.b16 %v713, %v712
        %v729 = vpack.c.b16 %v715, %v714
        %v730 = vpack.c.b16 %v717, %v716
        %v731 = vpack.c.b16 %v719, %v718
        %v732 = vpack.c.b16 %v721, %v720
        %v733 = vpack.c.b16 %v723, %v722
        %v734 = vpack.c.b16 %v725, %v724
        %v735 = vpack.c.b16 %v727, %v726
        %744 = vmatprep.subr.bf16.mxu0 0
        %745 = vmatpush1.bf16.msra.mxu0 %v728
        %746 = vmatprep.subr.bf16.mxu0 0
        %747 = vmatpush1.bf16.msra.mxu0 %v729
        %748 = vmatprep.subr.bf16.mxu0 0
        %749 = vmatpush1.bf16.msra.mxu0 %v730
        %750 = vmatprep.subr.bf16.mxu0 0
        %751 = vmatpush1.bf16.msra.mxu0 %v731
        %752 = vmatprep.subr.bf16.mxu0 0
        %753 = vmatpush1.bf16.msra.mxu0 %v732
        %754 = vmatprep.subr.bf16.mxu0 0
        %755 = vmatpush1.bf16.msra.mxu0 %v733
        %756 = vmatprep.subr.bf16.mxu0 0
        %757 = vmatpush1.bf16.msra.mxu0 %v734
        %758 = vmatprep.subr.bf16.mxu0 0
        %759 = vmatpush1.bf16.msra.mxu0 %v735
        %760 = vmatprep.subr.bf16.mxu0 0
        %761 = vmatpush1.bf16.msra.mxu0 0
        %762 = vmatprep.subr.bf16.mxu0 0
        %763 = vmatpush1.bf16.msra.mxu0 0
        %764 = vmatprep.subr.bf16.mxu0 0
        %765 = vmatpush1.bf16.msra.mxu0 0
        %766 = vmatprep.subr.bf16.mxu0 0
        %767 = vmatpush1.bf16.msra.mxu0 0
        %768 = vmatprep.subr.bf16.mxu0 0
        %769 = vmatpush1.bf16.msra.mxu0 0
        %770 = vmatprep.subr.bf16.mxu0 0
        %771 = vmatpush1.bf16.msra.mxu0 0
        %772 = vmatprep.subr.bf16.mxu0 0
        %773 = vmatpush1.bf16.msra.mxu0 0
        %774 = vmatprep.subr.bf16.mxu0 0
        %775 = vmatpush1.bf16.msra.mxu0 0
        %776 = vmatprep.mubr.bf16.mxu0 0
        %777 = vmatmul.mubr.bf16.gmra.mrb[0].mxu0 %v659
        %v778 = vpop.f32.mrb[0].mxu0
        %v779 = vadd.f32 %v695, %v778
        %v780 = vpop.f32.mrb[0].mxu0
        %v781 = vpop.f32.mrb[0].mxu0
        %v782 = vadd.f32 %v695, %v781
        %v783 = vpop.f32.mrb[0].mxu0
        %784 = vmatprep.mubr.bf16.mxu0 0
        %785 = vmatmul.mubr.bf16.gmra.mrb[0].mxu0 %v661
        %v786 = vpop.f32.mrb[0].mxu0
        %v787 = vadd.f32 %v695, %v786
        %v788 = vpop.f32.mrb[0].mxu0
        %v789 = vpop.f32.mrb[0].mxu0
        %v790 = vadd.f32 %v695, %v789
        %v791 = vpop.f32.mrb[0].mxu0
        %792 = vmatprep.mubr.bf16.mxu0 0
        %793 = vmatmul.mubr.bf16.gmra.mrb[0].mxu0 %v663
        %v794 = vpop.f32.mrb[0].mxu0
        %v795 = vadd.f32 %v695, %v794
        %v796 = vpop.f32.mrb[0].mxu0
        %v797 = vpop.f32.mrb[0].mxu0
        %v798 = vadd.f32 %v695, %v797
        %v799 = vpop.f32.mrb[0].mxu0
        %800 = vmatprep.mubr.bf16.mxu0 0
        %801 = vmatmul.mubr.bf16.gmra.mrb[0].mxu0 %v665
        %v802 = vpop.f32.mrb[0].mxu0
        %v803 = vadd.f32 %v695, %v802
        %v804 = vpop.f32.mrb[0].mxu0
        %v805 = vpop.f32.mrb[0].mxu0
        %v806 = vadd.f32 %v695, %v805
        %v807 = vpop.f32.mrb[0].mxu0
        %808 = vmatprep.mubr.bf16.mxu0 0
        %809 = vmatmul.mubr.bf16.gmra.mrb[0].mxu0 %v667
        %v810 = vpop.f32.mrb[0].mxu0
        %v811 = vadd.f32 %v695, %v810
        %v812 = vpop.f32.mrb[0].mxu0
        %v813 = vpop.f32.mrb[0].mxu0
        %v814 = vadd.f32 %v695, %v813
        %v815 = vpop.f32.mrb[0].mxu0
        %816 = vmatprep.mubr.bf16.mxu0 0
        %817 = vmatmul.mubr.bf16.gmra.mrb[0].mxu0 %v669
        %v818 = vpop.f32.mrb[0].mxu0
        %v819 = vadd.f32 %v695, %v818
        %v820 = vpop.f32.mrb[0].mxu0
        %v821 = vpop.f32.mrb[0].mxu0
        %v822 = vadd.f32 %v695, %v821
        %v823 = vpop.f32.mrb[0].mxu0
        %824 = vmatprep.mubr.bf16.mxu0 0
        %825 = vmatmul.mubr.bf16.gmra.mrb[0].mxu0 %v671
        %v826 = vpop.f32.mrb[0].mxu0
        %v827 = vadd.f32 %v695, %v826
        %v828 = vpop.f32.mrb[0].mxu0
        %v829 = vpop.f32.mrb[0].mxu0
        %v830 = vadd.f32 %v695, %v829
        %v831 = vpop.f32.mrb[0].mxu0
        %832 = vmatprep.mubr.bf16.mxu0 0
        %833 = vmatmul.mubr.bf16.gmra.mrb[0].mxu0 %v673
        %v834 = vpop.f32.mrb[0].mxu0
        %v835 = vadd.f32 %v695, %v834
        %v836 = vpop.f32.mrb[0].mxu0
        %v837 = vpop.f32.mrb[0].mxu0
        %v838 = vadd.f32 %v695, %v837
        %v839 = vpop.f32.mrb[0].mxu0
        %840 = vdwg.mxu0
        %v841 = vmax.f32 %v779, 0.0
        %v842 = vmax.f32 %v782, 0.0
        %v843 = vmax.f32 %v787, 0.0
        %v844 = vmax.f32 %v790, 0.0
        %v845 = vmax.f32 %v795, 0.0
        %v846 = vmax.f32 %v798, 0.0
        %v847 = vmax.f32 %v803, 0.0
        %v848 = vmax.f32 %v806, 0.0
        %v849 = vmax.f32 %v811, 0.0
        %v850 = vmax.f32 %v814, 0.0
        %v851 = vmax.f32 %v819, 0.0
        %v852 = vmax.f32 %v822, 0.0
        %v853 = vmax.f32 %v827, 0.0
        %v854 = vmax.f32 %v830, 0.0
        %v855 = vmax.f32 %v835, 0.0
        %v856 = vmax.f32 %v838, 0.0
        %v857 = vld [vmem:[%s5] sm:$0x1]
        %v858 = vunpack.c.l.bf16 %v857
        %v859 = vlaneseq
        %v860 = vshrl.u32 %v859, 7
        %v861 = vsub.s32 0, %v860
        %v862 = vrot.slane %v858, %v861
        %v863 = vmul.f32 %v841, %v862
        %v864 = vmul.f32 %v842, %v862
        %v865 = vmul.f32 %v843, %v862
        %v866 = vmul.f32 %v844, %v862
        %v867 = vmul.f32 %v845, %v862
        %v868 = vmul.f32 %v846, %v862
        %v869 = vmul.f32 %v847, %v862
        %v870 = vmul.f32 %v848, %v862
        %v871 = vmul.f32 %v849, %v862
        %v872 = vmul.f32 %v850, %v862
        %v873 = vmul.f32 %v851, %v862
        %v874 = vmul.f32 %v852, %v862
        %v875 = vmul.f32 %v853, %v862
        %v876 = vmul.f32 %v854, %v862
        %v877 = vmul.f32 %v855, %v862
        %v878 = vmul.f32 %v856, %v862
        %879 = vadd.xlane.f32.xlu0 %v863
        %v880 = vpop.xlane.xlu0 %879
        %881 = vadd.xlane.f32.xlu0 %v864
        %v882 = vpop.xlane.xlu0 %881
        %883 = vadd.xlane.f32.xlu0 %v865
        %v884 = vpop.xlane.xlu0 %883
        %885 = vadd.xlane.f32.xlu0 %v866
        %v886 = vpop.xlane.xlu0 %885
        %887 = vadd.xlane.f32.xlu0 %v867
        %v888 = vpop.xlane.xlu0 %887
        %889 = vadd.xlane.f32.xlu0 %v868
        %v890 = vpop.xlane.xlu0 %889
        %891 = vadd.xlane.f32.xlu0 %v869
        %v892 = vpop.xlane.xlu0 %891
        %893 = vadd.xlane.f32.xlu0 %v870
        %v894 = vpop.xlane.xlu0 %893
        %895 = vadd.xlane.f32.xlu0 %v871
        %v896 = vpop.xlane.xlu0 %895
        %897 = vadd.xlane.f32.xlu0 %v872
        %v898 = vpop.xlane.xlu0 %897
        %899 = vadd.xlane.f32.xlu0 %v873
        %v900 = vpop.xlane.xlu0 %899
        %901 = vadd.xlane.f32.xlu0 %v874
        %v902 = vpop.xlane.xlu0 %901
        %903 = vadd.xlane.f32.xlu0 %v875
        %v904 = vpop.xlane.xlu0 %903
        %905 = vadd.xlane.f32.xlu0 %v876
        %v906 = vpop.xlane.xlu0 %905
        %907 = vadd.xlane.f32.xlu0 %v877
        %v908 = vpop.xlane.xlu0 %907
        %909 = vadd.xlane.f32.xlu0 %v878
        %v910 = vpop.xlane.xlu0 %909
        %s911 = sld [smem:[#allocation9]]
        %v912 = vstv %s911
        %v913 = vadd.f32 %v880, %v912
        %v914 = vadd.f32 %v882, %v912
        %v915 = vadd.f32 %v884, %v912
        %v916 = vadd.f32 %v886, %v912
        %v917 = vadd.f32 %v888, %v912
        %v918 = vadd.f32 %v890, %v912
        %v919 = vadd.f32 %v892, %v912
        %v920 = vadd.f32 %v894, %v912
        %v921 = vadd.f32 %v896, %v912
        %v922 = vadd.f32 %v898, %v912
        %v923 = vadd.f32 %v900, %v912
        %v924 = vadd.f32 %v902, %v912
        %v925 = vadd.f32 %v904, %v912
        %v926 = vadd.f32 %v906, %v912
        %v927 = vadd.f32 %v908, %v912
        %v928 = vadd.f32 %v910, %v912
        %s929 = scalar_lea.vmem [#allocation8], 64
        %v930 = vld [vmem:[%s929] sm:$0xf]
        %v931 = vld [vmem:[%s929 + $0x4] sm:$0xf]
        %v932 = vld [vmem:[%s929 + $0x8] sm:$0xf]
        %v933 = vld [vmem:[%s929 + $0xc] sm:$0xf]
        %v934 = vld [vmem:[%s929 + $0x10] sm:$0xf]
        %v935 = vld [vmem:[%s929 + $0x14] sm:$0xf]
        %v936 = vld [vmem:[%s929 + $0x18] sm:$0xf]
        %v937 = vld [vmem:[%s929 + $0x1c] sm:$0xf]
        %v938 = vld [vmem:[%s929 + $0x20] sm:$0xf]
        %v939 = vld [vmem:[%s929 + $0x24] sm:$0xf]
        %v940 = vld [vmem:[%s929 + $0x28] sm:$0xf]
        %v941 = vld [vmem:[%s929 + $0x2c] sm:$0xf]
        %v942 = vld [vmem:[%s929 + $0x30] sm:$0xf]
        %v943 = vld [vmem:[%s929 + $0x34] sm:$0xf]
        %v944 = vld [vmem:[%s929 + $0x38] sm:$0xf]
        %v945 = vld [vmem:[%s929 + $0x3c] sm:$0xf]
        %v946 = vld [vmem:[%s4 + $0x1] sm:$0x1]
        %v947 = vlaneseq
        %v948 = vshrl.u32 %v947, 7
        %v949 = vsub.s32 0, %v948
        %v950 = vrot.slane %v946, %v949
        %v967 = vunpack.c.l.b16 %v930
        %v968 = vunpack.c.l.b16 %v931
        %v969 = vunpack.c.l.b16 %v932
        %v970 = vunpack.c.l.b16 %v933
        %v971 = vunpack.c.l.b16 %v934
        %v972 = vunpack.c.l.b16 %v935
        %v973 = vunpack.c.l.b16 %v936
        %v974 = vunpack.c.l.b16 %v937
        %v975 = vunpack.c.l.b16 %v938
        %v976 = vunpack.c.l.b16 %v939
        %v977 = vunpack.c.l.b16 %v940
        %v978 = vunpack.c.l.b16 %v941
        %v979 = vunpack.c.l.b16 %v942
        %v980 = vunpack.c.l.b16 %v943
        %v981 = vunpack.c.l.b16 %v944
        %v982 = vunpack.c.l.b16 %v945
        %v983 = vpack.c.b16 %v968, %v967
        %v984 = vpack.c.b16 %v970, %v969
        %v985 = vpack.c.b16 %v972, %v971
        %v986 = vpack.c.b16 %v974, %v973
        %v987 = vpack.c.b16 %v976, %v975
        %v988 = vpack.c.b16 %v978, %v977
        %v989 = vpack.c.b16 %v980, %v979
        %v990 = vpack.c.b16 %v982, %v981
        %999 = vmatprep.subr.bf16.mxu0 0
        %1000 = vmatpush1.bf16.msra.mxu0 %v983
        %1001 = vmatprep.subr.bf16.mxu0 0
        %1002 = vmatpush1.bf16.msra.mxu0 %v984
        %1003 = vmatprep.subr.bf16.mxu0 0
        %1004 = vmatpush1.bf16.msra.mxu0 %v985
        %1005 = vmatprep.subr.bf16.mxu0 0
        %1006 = vmatpush1.bf16.msra.mxu0 %v986
        %1007 = vmatprep.subr.bf16.mxu0 0
        %1008 = vmatpush1.bf16.msra.mxu0 %v987
        %1009 = vmatprep.subr.bf16.mxu0 0
        %1010 = vmatpush1.bf16.msra.mxu0 %v988
        %1011 = vmatprep.subr.bf16.mxu0 0
        %1012 = vmatpush1.bf16.msra.mxu0 %v989
        %1013 = vmatprep.subr.bf16.mxu0 0
        %1014 = vmatpush1.bf16.msra.mxu0 %v990
        %1015 = vmatprep.subr.bf16.mxu0 0
        %1016 = vmatpush1.bf16.msra.mxu0 0
        %1017 = vmatprep.subr.bf16.mxu0 0
        %1018 = vmatpush1.bf16.msra.mxu0 0
        %1019 = vmatprep.subr.bf16.mxu0 0
        %1020 = vmatpush1.bf16.msra.mxu0 0
        %1021 = vmatprep.subr.bf16.mxu0 0
        %1022 = vmatpush1.bf16.msra.mxu0 0
        %1023 = vmatprep.subr.bf16.mxu0 0
        %1024 = vmatpush1.bf16.msra.mxu0 0
        %1025 = vmatprep.subr.bf16.mxu0 0
        %1026 = vmatpush1.bf16.msra.mxu0 0
        %1027 = vmatprep.subr.bf16.mxu0 0
        %1028 = vmatpush1.bf16.msra.mxu0 0
        %1029 = vmatprep.subr.bf16.mxu0 0
        %1030 = vmatpush1.bf16.msra.mxu0 0
        %1031 = vmatprep.mubr.bf16.mxu0 0
        %1032 = vmatmul.mubr.bf16.gmra.mrb[0].mxu0 %v660
        %v1033 = vpop.f32.mrb[0].mxu0
        %v1034 = vadd.f32 %v950, %v1033
        %v1035 = vpop.f32.mrb[0].mxu0
        %v1036 = vpop.f32.mrb[0].mxu0
        %v1037 = vadd.f32 %v950, %v1036
        %v1038 = vpop.f32.mrb[0].mxu0
        %1039 = vmatprep.mubr.bf16.mxu0 0
        %1040 = vmatmul.mubr.bf16.gmra.mrb[0].mxu0 %v662
        %v1041 = vpop.f32.mrb[0].mxu0
        %v1042 = vadd.f32 %v950, %v1041
        %v1043 = vpop.f32.mrb[0].mxu0
        %v1044 = vpop.f32.mrb[0].mxu0
        %v1045 = vadd.f32 %v950, %v1044
        %v1046 = vpop.f32.mrb[0].mxu0
        %1047 = vmatprep.mubr.bf16.mxu0 0
        %1048 = vmatmul.mubr.bf16.gmra.mrb[0].mxu0 %v664
        %v1049 = vpop.f32.mrb[0].mxu0
        %v1050 = vadd.f32 %v950, %v1049
        %v1051 = vpop.f32.mrb[0].mxu0
        %v1052 = vpop.f32.mrb[0].mxu0
        %v1053 = vadd.f32 %v950, %v1052
        %v1054 = vpop.f32.mrb[0].mxu0
        %1055 = vmatprep.mubr.bf16.mxu0 0
        %1056 = vmatmul.mubr.bf16.gmra.mrb[0].mxu0 %v666
        %v1057 = vpop.f32.mrb[0].mxu0
        %v1058 = vadd.f32 %v950, %v1057
        %v1059 = vpop.f32.mrb[0].mxu0
        %v1060 = vpop.f32.mrb[0].mxu0
        %v1061 = vadd.f32 %v950, %v1060
        %v1062 = vpop.f32.mrb[0].mxu0
        %1063 = vmatprep.mubr.bf16.mxu0 0
        %1064 = vmatmul.mubr.bf16.gmra.mrb[0].mxu0 %v668
        %v1065 = vpop.f32.mrb[0].mxu0
        %v1066 = vadd.f32 %v950, %v1065
        %v1067 = vpop.f32.mrb[0].mxu0
        %v1068 = vpop.f32.mrb[0].mxu0
        %v1069 = vadd.f32 %v950, %v1068
        %v1070 = vpop.f32.mrb[0].mxu0
        %1071 = vmatprep.mubr.bf16.mxu0 0
        %1072 = vmatmul.mubr.bf16.gmra.mrb[0].mxu0 %v670
        %v1073 = vpop.f32.mrb[0].mxu0
        %v1074 = vadd.f32 %v950, %v1073
        %v1075 = vpop.f32.mrb[0].mxu0
        %v1076 = vpop.f32.mrb[0].mxu0
        %v1077 = vadd.f32 %v950, %v1076
        %v1078 = vpop.f32.mrb[0].mxu0
        %1079 = vmatprep.mubr.bf16.mxu0 0
        %1080 = vmatmul.mubr.bf16.gmra.mrb[0].mxu0 %v672
        %v1081 = vpop.f32.mrb[0].mxu0
        %v1082 = vadd.f32 %v950, %v1081
        %v1083 = vpop.f32.mrb[0].mxu0
        %v1084 = vpop.f32.mrb[0].mxu0
        %v1085 = vadd.f32 %v950, %v1084
        %v1086 = vpop.f32.mrb[0].mxu0
        %1087 = vmatprep.mubr.bf16.mxu0 0
        %1088 = vmatmul.mubr.bf16.gmra.mrb[0].mxu0 %v674
        %v1089 = vpop.f32.mrb[0].mxu0
        %v1090 = vadd.f32 %v950, %v1089
        %v1091 = vpop.f32.mrb[0].mxu0
        %v1092 = vpop.f32.mrb[0].mxu0
        %v1093 = vadd.f32 %v950, %v1092
        %v1094 = vpop.f32.mrb[0].mxu0
        %1095 = vdwg.mxu0
        %v1096 = vmax.f32 %v1034, 0.0
        %v1097 = vmax.f32 %v1037, 0.0
        %v1098 = vmax.f32 %v1042, 0.0
        %v1099 = vmax.f32 %v1045, 0.0
        %v1100 = vmax.f32 %v1050, 0.0
        %v1101 = vmax.f32 %v1053, 0.0
        %v1102 = vmax.f32 %v1058, 0.0
        %v1103 = vmax.f32 %v1061, 0.0
        %v1104 = vmax.f32 %v1066, 0.0
        %v1105 = vmax.f32 %v1069, 0.0
        %v1106 = vmax.f32 %v1074, 0.0
        %v1107 = vmax.f32 %v1077, 0.0
        %v1108 = vmax.f32 %v1082, 0.0
        %v1109 = vmax.f32 %v1085, 0.0
        %v1110 = vmax.f32 %v1090, 0.0
        %v1111 = vmax.f32 %v1093, 0.0
        %v1112 = vlaneseq
        %v1113 = vshrl.u32 %v1112, 7
        %v1114 = vsub.s32 1, %v1113
        %v1115 = vrot.slane %v858, %v1114
        %v1116 = vmul.f32 %v1096, %v1115
        %v1117 = vmul.f32 %v1097, %v1115
        %v1118 = vmul.f32 %v1098, %v1115
        %v1119 = vmul.f32 %v1099, %v1115
        %v1120 = vmul.f32 %v1100, %v1115
        %v1121 = vmul.f32 %v1101, %v1115
        %v1122 = vmul.f32 %v1102, %v1115
        %v1123 = vmul.f32 %v1103, %v1115
        %v1124 = vmul.f32 %v1104, %v1115
        %v1125 = vmul.f32 %v1105, %v1115
        %v1126 = vmul.f32 %v1106, %v1115
        %v1127 = vmul.f32 %v1107, %v1115
        %v1128 = vmul.f32 %v1108, %v1115
        %v1129 = vmul.f32 %v1109, %v1115
        %v1130 = vmul.f32 %v1110, %v1115
        %v1131 = vmul.f32 %v1111, %v1115
        %1132 = vadd.xlane.f32.xlu0 %v1116
        %v1133 = vpop.xlane.xlu0 %1132
        %1134 = vadd.xlane.f32.xlu0 %v1117
        %v1135 = vpop.xlane.xlu0 %1134
        %1136 = vadd.xlane.f32.xlu0 %v1118
        %v1137 = vpop.xlane.xlu0 %1136
        %1138 = vadd.xlane.f32.xlu0 %v1119
        %v1139 = vpop.xlane.xlu0 %1138
        %1140 = vadd.xlane.f32.xlu0 %v1120
        %v1141 = vpop.xlane.xlu0 %1140
        %1142 = vadd.xlane.f32.xlu0 %v1121
        %v1143 = vpop.xlane.xlu0 %1142
        %1144 = vadd.xlane.f32.xlu0 %v1122
        %v1145 = vpop.xlane.xlu0 %1144
        %1146 = vadd.xlane.f32.xlu0 %v1123
        %v1147 = vpop.xlane.xlu0 %1146
        %1148 = vadd.xlane.f32.xlu0 %v1124
        %v1149 = vpop.xlane.xlu0 %1148
        %1150 = vadd.xlane.f32.xlu0 %v1125
        %v1151 = vpop.xlane.xlu0 %1150
        %1152 = vadd.xlane.f32.xlu0 %v1126
        %v1153 = vpop.xlane.xlu0 %1152
        %1154 = vadd.xlane.f32.xlu0 %v1127
        %v1155 = vpop.xlane.xlu0 %1154
        %1156 = vadd.xlane.f32.xlu0 %v1128
        %v1157 = vpop.xlane.xlu0 %1156
        %1158 = vadd.xlane.f32.xlu0 %v1129
        %v1159 = vpop.xlane.xlu0 %1158
        %1160 = vadd.xlane.f32.xlu0 %v1130
        %v1161 = vpop.xlane.xlu0 %1160
        %1162 = vadd.xlane.f32.xlu0 %v1131
        %v1163 = vpop.xlane.xlu0 %1162
        %s1164 = sld [smem:[#allocation9 + $0x1]]
        %v1165 = vstv %s1164
        %v1166 = vadd.f32 %v1133, %v1165
        %v1167 = vadd.f32 %v1135, %v1165
        %v1168 = vadd.f32 %v1137, %v1165
        %v1169 = vadd.f32 %v1139, %v1165
        %v1170 = vadd.f32 %v1141, %v1165
        %v1171 = vadd.f32 %v1143, %v1165
        %v1172 = vadd.f32 %v1145, %v1165
        %v1173 = vadd.f32 %v1147, %v1165
        %v1174 = vadd.f32 %v1149, %v1165
        %v1175 = vadd.f32 %v1151, %v1165
        %v1176 = vadd.f32 %v1153, %v1165
        %v1177 = vadd.f32 %v1155, %v1165
        %v1178 = vadd.f32 %v1157, %v1165
        %v1179 = vadd.f32 %v1159, %v1165
        %v1180 = vadd.f32 %v1161, %v1165
        %v1181 = vadd.f32 %v1163, %v1165
        %v1198 = vlaneseq
        %v1199 = vand.u32 %v1198, 127
        %v1200 = vlaneseq
        %v1201 = vshrl.u32 %v1200, 7
        %v1202 = vsub.s32 %v1199, %v1201
        %v1203 = vrot.slane %v913, %v1202
        %v1204 = vadd.s32 %v1199, 4294967288
        %v1205 = vlaneseq
        %v1206 = vshrl.u32 %v1205, 7
        %v1207 = vsub.s32 %v1204, %v1206
        %v1208 = vrot.slane %v914, %v1207
        %vm1209 = vcmask 130112
        %v1210 = vsel %vm1209, %v1208, %v1203
        %v1211 = vadd.s32 %v1199, 4294967280
        %v1212 = vlaneseq
        %v1213 = vshrl.u32 %v1212, 7
        %v1214 = vsub.s32 %v1211, %v1213
        %v1215 = vrot.slane %v915, %v1214
        %vm1216 = vcmask 195712
        %v1217 = vsel %vm1216, %v1215, %v1210
        %v1218 = vadd.s32 %v1199, 4294967272
        %v1219 = vlaneseq
        %v1220 = vshrl.u32 %v1219, 7
        %v1221 = vsub.s32 %v1218, %v1220
        %v1222 = vrot.slane %v916, %v1221
        %vm1223 = vcmask 261312
        %v1224 = vsel %vm1223, %v1222, %v1217
        %v1225 = vadd.s32 %v1199, 4294967264
        %v1226 = vlaneseq
        %v1227 = vshrl.u32 %v1226, 7
        %v1228 = vsub.s32 %v1225, %v1227
        %v1229 = vrot.slane %v917, %v1228
        %vm1230 = vcmask 326912
        %v1231 = vsel %vm1230, %v1229, %v1224
        %v1232 = vadd.s32 %v1199, 4294967256
        %v1233 = vlaneseq
        %v1234 = vshrl.u32 %v1233, 7
        %v1235 = vsub.s32 %v1232, %v1234
        %v1236 = vrot.slane %v918, %v1235
        %vm1237 = vcmask 392512
        %v1238 = vsel %vm1237, %v1236, %v1231
        %v1239 = vadd.s32 %v1199, 4294967248
        %v1240 = vlaneseq
        %v1241 = vshrl.u32 %v1240, 7
        %v1242 = vsub.s32 %v1239, %v1241
        %v1243 = vrot.slane %v919, %v1242
        %vm1244 = vcmask 458112
        %v1245 = vsel %vm1244, %v1243, %v1238
        %v1246 = vadd.s32 %v1199, 4294967240
        %v1247 = vlaneseq
        %v1248 = vshrl.u32 %v1247, 7
        %v1249 = vsub.s32 %v1246, %v1248
        %v1250 = vrot.slane %v920, %v1249
        %vm1251 = vcmask 523712
        %v1252 = vsel %vm1251, %v1250, %v1245
        %v1253 = vadd.s32 %v1199, 4294967232
        %v1254 = vlaneseq
        %v1255 = vshrl.u32 %v1254, 7
        %v1256 = vsub.s32 %v1253, %v1255
        %v1257 = vrot.slane %v921, %v1256
        %vm1258 = vcmask 589312
        %v1259 = vsel %vm1258, %v1257, %v1252
        %v1260 = vadd.s32 %v1199, 4294967224
        %v1261 = vlaneseq
        %v1262 = vshrl.u32 %v1261, 7
        %v1263 = vsub.s32 %v1260, %v1262
        %v1264 = vrot.slane %v922, %v1263
        %vm1265 = vcmask 654912
        %v1266 = vsel %vm1265, %v1264, %v1259
        %v1267 = vadd.s32 %v1199, 4294967216
        %v1268 = vlaneseq
        %v1269 = vshrl.u32 %v1268, 7
        %v1270 = vsub.s32 %v1267, %v1269
        %v1271 = vrot.slane %v923, %v1270
        %vm1272 = vcmask 720512
        %v1273 = vsel %vm1272, %v1271, %v1266
        %v1274 = vadd.s32 %v1199, 4294967208
        %v1275 = vlaneseq
        %v1276 = vshrl.u32 %v1275, 7
        %v1277 = vsub.s32 %v1274, %v1276
        %v1278 = vrot.slane %v924, %v1277
        %vm1279 = vcmask 786112
        %v1280 = vsel %vm1279, %v1278, %v1273
        %v1281 = vadd.s32 %v1199, 4294967200
        %v1282 = vlaneseq
        %v1283 = vshrl.u32 %v1282, 7
        %v1284 = vsub.s32 %v1281, %v1283
        %v1285 = vrot.slane %v925, %v1284
        %vm1286 = vcmask 851712
        %v1287 = vsel %vm1286, %v1285, %v1280
        %v1288 = vadd.s32 %v1199, 4294967192
        %v1289 = vlaneseq
        %v1290 = vshrl.u32 %v1289, 7
        %v1291 = vsub.s32 %v1288, %v1290
        %v1292 = vrot.slane %v926, %v1291
        %vm1293 = vcmask 917312
        %v1294 = vsel %vm1293, %v1292, %v1287
        %v1295 = vadd.s32 %v1199, 4294967184
        %v1296 = vlaneseq
        %v1297 = vshrl.u32 %v1296, 7
        %v1298 = vsub.s32 %v1295, %v1297
        %v1299 = vrot.slane %v927, %v1298
        %vm1300 = vcmask 982912
        %v1301 = vsel %vm1300, %v1299, %v1294
        %v1302 = vadd.s32 %v1199, 4294967176
        %v1303 = vlaneseq
        %v1304 = vshrl.u32 %v1303, 7
        %v1305 = vsub.s32 %v1302, %v1304
        %v1306 = vrot.slane %v928, %v1305
        %vm1307 = vcmask 1048512
        %v1308 = vsel %vm1307, %v1306, %v1301
        %v1326 = vlaneseq
        %v1327 = vshrl.u32 %v1326, 7
        %v1328 = vsub.s32 %v1199, %v1327
        %v1329 = vrot.slane %v1166, %v1328
        %v1330 = vlaneseq
        %v1331 = vshrl.u32 %v1330, 7
        %v1332 = vsub.s32 %v1204, %v1331
        %v1333 = vrot.slane %v1167, %v1332
        %v1334 = vsel %vm1209, %v1333, %v1329
        %v1335 = vlaneseq
        %v1336 = vshrl.u32 %v1335, 7
        %v1337 = vsub.s32 %v1211, %v1336
        %v1338 = vrot.slane %v1168, %v1337
        %v1339 = vsel %vm1216, %v1338, %v1334
        %v1340 = vlaneseq
        %v1341 = vshrl.u32 %v1340, 7
        %v1342 = vsub.s32 %v1218, %v1341
        %v1343 = vrot.slane %v1169, %v1342
        %v1344 = vsel %vm1223, %v1343, %v1339
        %v1345 = vlaneseq
        %v1346 = vshrl.u32 %v1345, 7
        %v1347 = vsub.s32 %v1225, %v1346
        %v1348 = vrot.slane %v1170, %v1347
        %v1349 = vsel %vm1230, %v1348, %v1344
        %v1350 = vlaneseq
        %v1351 = vshrl.u32 %v1350, 7
        %v1352 = vsub.s32 %v1232, %v1351
        %v1353 = vrot.slane %v1171, %v1352
        %v1354 = vsel %vm1237, %v1353, %v1349
        %v1355 = vlaneseq
        %v1356 = vshrl.u32 %v1355, 7
        %v1357 = vsub.s32 %v1239, %v1356
        %v1358 = vrot.slane %v1172, %v1357
        %v1359 = vsel %vm1244, %v1358, %v1354
        %v1360 = vlaneseq
        %v1361 = vshrl.u32 %v1360, 7
        %v1362 = vsub.s32 %v1246, %v1361
        %v1363 = vrot.slane %v1173, %v1362
        %v1364 = vsel %vm1251, %v1363, %v1359
        %v1365 = vlaneseq
        %v1366 = vshrl.u32 %v1365, 7
        %v1367 = vsub.s32 %v1253, %v1366
        %v1368 = vrot.slane %v1174, %v1367
        %v1369 = vsel %vm1258, %v1368, %v1364
        %v1370 = vlaneseq
        %v1371 = vshrl.u32 %v1370, 7
        %v1372 = vsub.s32 %v1260, %v1371
        %v1373 = vrot.slane %v1175, %v1372
        %v1374 = vsel %vm1265, %v1373, %v1369
        %v1375 = vlaneseq
        %v1376 = vshrl.u32 %v1375, 7
        %v1377 = vsub.s32 %v1267, %v1376
        %v1378 = vrot.slane %v1176, %v1377
        %v1379 = vsel %vm1272, %v1378, %v1374
        %v1380 = vlaneseq
        %v1381 = vshrl.u32 %v1380, 7
        %v1382 = vsub.s32 %v1274, %v1381
        %v1383 = vrot.slane %v1177, %v1382
        %v1384 = vsel %vm1279, %v1383, %v1379
        %v1385 = vlaneseq
        %v1386 = vshrl.u32 %v1385, 7
        %v1387 = vsub.s32 %v1281, %v1386
        %v1388 = vrot.slane %v1178, %v1387
        %v1389 = vsel %vm1286, %v1388, %v1384
        %v1390 = vlaneseq
        %v1391 = vshrl.u32 %v1390, 7
        %v1392 = vsub.s32 %v1288, %v1391
        %v1393 = vrot.slane %v1179, %v1392
        %v1394 = vsel %vm1293, %v1393, %v1389
        %v1395 = vlaneseq
        %v1396 = vshrl.u32 %v1395, 7
        %v1397 = vsub.s32 %v1295, %v1396
        %v1398 = vrot.slane %v1180, %v1397
        %v1399 = vsel %vm1300, %v1398, %v1394
        %v1400 = vlaneseq
        %v1401 = vshrl.u32 %v1400, 7
        %v1402 = vsub.s32 %v1302, %v1401
        %v1403 = vrot.slane %v1181, %v1402
        %v1404 = vsel %vm1307, %v1403, %v1399
        %vm1406 = vcmask 1040384
        %v1407 = vsel %vm1406, %v1308, %v1404
        %1408 = vst [vmem:[%s339] sm:$0x3] %v1407
        %s1409 = sand.u32 %s186, 1
        %s1410 = scalar_lea.sflag [#allocation4], %s1409
        %s1411 = sand.u32 %s186, 1
        %s1412 = smul.addr %s1411, 2
        %s1413 = scalar_lea.vmem [#allocation10], %s1412
        // Predicated region
        $region65: #{tpu_custom_call.1} parent=47 // pred_check
          %p1414 = pneg %p196
        $region66: #{tpu_custom_call.1} parent=47 // pred_check_branch
          %1416 = sbr.rel (%p1414) target = $region68
        $region67: #{tpu_custom_call.1} parent=47 // pred_region
          %s1418 = ssub.s32 32, 32
          %1419 = vsyncadd %s1410, %s1418
          %s1420 = smul.addr %s26, 32
          %s1421 = scalar_lea.hbm %s7, %s1420
          %s1423 = sshll.u32 %s1413, 4
          %s1424 = int_to_ptr.vmem [resolvable:$true] %s1423
          %1426 = dma.vmem_to_hbm [thread:$0]  %s1424, 32, %s1421, %s1410
        $region68: #{tpu_custom_call.1} parent=47 // pred_fallthru
          _
      $region48: #{tpu_custom_call.1} parent=5 // pred_fallthru
        _
      %p1427 = scmp.le.s32.totalorder 2, %s21
      // Predicated region
      $region69: #{tpu_custom_call.1} parent=5 // pred_check
        %p1428 = pneg %p1427
      $region70: #{tpu_custom_call.1} parent=5 // pred_check_branch
        %1430 = sbr.rel (%p1428) target = $region72
      $region71: #{tpu_custom_call.1} parent=5 // pred_region
        %s1431 = ssub.s32 %s21, 2
        // Predicated region
        $region73: #{tpu_custom_call.1} parent=71 // pred_check
          %p1432 = pneg %p202
        $region74: #{tpu_custom_call.1} parent=71 // pred_check_branch
          %1434 = sbr.rel (%p1432) target = $region76
        $region75: #{tpu_custom_call.1} parent=71 // pred_region
          %s1435 = sand.u32 %s187, 1
          %s1436 = scalar_lea.sflag [#allocation4], %s1435
          %s1437 = sand.u32 %s187, 1
          %s1438 = smul.addr %s1437, 2
          %s1439 = scalar_lea.vmem [#allocation10], %s1438
          %1440 = dma.done %s1436, 32
        $region76: #{tpu_custom_call.1} parent=71 // pred_fallthru
          _
      $region72: #{tpu_custom_call.1} parent=5 // pred_fallthru
        _
    $region6: #{tpu_custom_call.1} parent=1 // loop_footer
      %s25 = sadd.s32 1, %s21
    $region7: #{tpu_custom_call.1} parent=1 // loop_footer_branch
      %20 = sbr.rel target = $region3
    $region8: #{tpu_custom_call.1} parent=1 // loop_exit
      _
    %1441 = vsyncpa [#allocation3], 1
    %s1442 = scalar_lea.sflag [#allocation3], 1
    %1443 = vsyncpa %s1442, 1
    %1444 = vsyncpa [#allocation7], 1
    %1445 = vsyncpa [#allocation4], 1
    %s1446 = scalar_lea.sflag [#allocation4], 1
    %1447 = vsyncpa %s1446, 1
    %1448 = vsyncpa [#allocation5], 1
    %s1449 = scalar_lea.sflag [#allocation5], 1
    %1450 = vsyncpa %s1449, 1

// kernel: tpu_custom_call.1
$region0: #{tpu_custom_call.1}
  #allocation0 [shape = 'u32[]', space=smem, size = 0x4, offset = 0x4, fixed_abs, tag = 'smem constant byte address 0x4 - core index']
  #allocation1 [shape = 'u32[144,128]{1,0:T(1,128)}', space=vmem, size = 0x12000, scoped, tag = 'internal scratch']
  %s0 = inlined_call_operand.hbm [shape: bf16[256,128], index: 0, kind: input, shape index: {}]
  %s1 = inlined_call_operand.hbm [shape: bf16[128,256], index: 1, kind: input, shape index: {}]
  %s2 = inlined_call_operand.vmem [shape: f32[1,256], index: 2, kind: input, shape index: {}]
  %s3 = inlined_call_operand.hbm [shape: bf16[2,128,128], index: 3, kind: input, shape index: {}]
  %s4 = inlined_call_operand.vmem [shape: f32[2,128], index: 4, kind: input, shape index: {}]
  %s5 = inlined_call_operand.vmem [shape: bf16[2,128], index: 5, kind: input, shape index: {}]
  %s6 = inlined_call_operand.vmem [shape: f32[2], index: 6, kind: input, shape index: {}]
  %s7 = inlined_call_operand.hbm [shape: f32[2,256], index: 7, kind: output, shape index: {}]
  %s8 = sld [smem:[#allocation0]]
  $region77: #{tpu_custom_call.1} parent=0
    _
  %s10 = ssub.s32 1, %s8
  %s11 = scalar_select 0, %s10, %s8
  $region1: #{tpu_custom_call.1} parent=0
    #allocation2 [shape = 'u8[65536]{0}', space=vmem, size = 0x10000, scoped, tag = 'input window, operand 0']
    #allocation3 [shape = 's32[2]{0}', space=sflag, size = 0x8, scoped, tag = 'scoped memory for tpu_custom_call.1']
    #allocation4 [shape = 's32[2]{0}', space=sflag, size = 0x8, scoped, tag = 'scoped memory for tpu_custom_call.1']
    #allocation5 [shape = 's32[2]{0}', space=sflag, size = 0x8, scoped, tag = 'scoped memory for tpu_custom_call.1']
    #allocation6 [shape = 'u8[65536]{0}', space=vmem, size = 0x10000, scoped, tag = 'input window, operand 1, single buffered']
    #allocation7 [shape = 's32[1]{0}', space=sflag, size = 0x4, scoped, tag = 'scoped memory for tpu_custom_call.1']
    #allocation8 [shape = 'u8[65536]{0}', space=vmem, size = 0x10000, scoped, tag = 'input window, operand 3, single buffered']
    #allocation9 [shape = 'u8[512]{0}', space=smem, size = 0x200, scoped, tag = 'input window, operand 6, single buffered']
    #allocation10 [shape = 'u8[2048]{0}', space=vmem, size = 0x800, scoped, tag = 'output window, operand 0']
    %12 = vsyncpa [#allocation3], 0
    %s13 = scalar_lea.sflag [#allocation3], 1
    %14 = vsyncpa %s13, 0
    %15 = vsyncpa [#allocation7], 0
    %16 = vsyncpa [#allocation5], 0
    %17 = vsyncpa [#allocation4], 0
    %s18 = scalar_lea.sflag [#allocation4], 1
    %19 = vsyncpa %s18, 0
    loop: start=0, step=1, limit=4
    $region2: #{tpu_custom_call.1} parent=1 // loop_pre_header
      _
    $region3: #{tpu_custom_call.1} parent=1 // loop_header
      %s21 = sphi 0, %s25
      %p22 = scmp.ge.s32.totalorder %s21, 4
      %s31 = sphi 0, %s33
      %s34 = sphi 0, %s31
      %s35 = sphi 0, %s34
      %s51 = sphi 0, %s35
      %s55 = sphi 0, %s55
      %s57 = sphi 0, %s55
      %s58 = sphi 0, %s57
      %s72 = sphi 0, %s58
      %s76 = sphi 0, %s76
      %s78 = sphi 0, %s76
      %s79 = sphi 0, %s78
      %s93 = sphi 0, %s79
      %s97 = sphi 0, %s97
      %s99 = sphi 0, %s97
      %s100 = sphi 0, %s99
      %s114 = sphi 0, %s100
      %s118 = sphi 0, %s118
      %s120 = sphi 0, %s118
      %s121 = sphi 0, %s120
      %s135 = sphi 0, %s121
      %s139 = sphi 0, %s139
      %s141 = sphi 0, %s139
      %s142 = sphi 0, %s141
      %s156 = sphi 0, %s142
      %s160 = sphi 0, %s160
      %s162 = sphi 0, %s160
      %s163 = sphi 0, %s162
      %s177 = sphi 0, %s163
      %s183 = sphi 0, %s185
      %s186 = sphi 0, %s183
      %s187 = sphi 0, %s186
      %s203 = sphi 0, %s187
    $region4: #{tpu_custom_call.1} parent=1 // loop_header_branch
      %24 = sbr.rel (%p22) target = $region8
    $region5: #{tpu_custom_call.1} parent=1 // loop_body
      %s26 = ssub.s32 %s21, 1
      %s27 = ssub.s32 %s21, 2
      %s28 = sadd.s32 %s21, 1
      %s29 = ssub.s32 %s21, %s28
      %p30 = scmp.eq.s32.totalorder %s29, 0
      %s32 = sadd.s32 %s31, 1
      %s33 = scalar_select %p30, %s31, %s32
      %p36 = pneg %p30
      %p37 = scmp.eq.s32.totalorder %s21, 1
      %p38 = por %p36, %p37
      %p39 = scmp.ne.s32.totalorder %s31, %s34
      %p40 = scmp.eq.s32.totalorder %s21, 0
      %p41 = por %p39, %p40
      %p42 = scmp.ne.s32.totalorder %s31, %s34
      %p43 = scmp.eq.s32.totalorder %s26, 1
      %p44 = por %p42, %p43
      %p45 = scmp.ne.s32.totalorder %s34, %s35
      %p46 = scmp.eq.s32.totalorder %s26, 0
      %p47 = por %p45, %p46
      %p48 = scmp.ne.s32.totalorder %s34, %s35
      %p49 = scmp.eq.s32.totalorder %s27, 1
      %p50 = por %p48, %p49
      %p52 = scmp.ne.s32.totalorder %s35, %s51
      %p53 = scmp.eq.s32.totalorder %s27, 0
      %p54 = por %p52, %p53
      %s56 = sadd.s32 %s55, 1
      %p59 = scmp.eq.s32.totalorder %s21, 1
      %p60 = scmp.ne.s32.totalorder %s55, %s57
      %p61 = scmp.eq.s32.totalorder %s21, 0
      %p62 = por %p60, %p61
      %p63 = scmp.ne.s32.totalorder %s55, %s57
      %p64 = scmp.eq.s32.totalorder %s26, 1
      %p65 = por %p63, %p64
      %p66 = scmp.ne.s32.totalorder %s57, %s58
      %p67 = scmp.eq.s32.totalorder %s26, 0
      %p68 = por %p66, %p67
      %p69 = scmp.ne.s32.totalorder %s57, %s58
      %p70 = scmp.eq.s32.totalorder %s27, 1
      %p71 = por %p69, %p70
      %p73 = scmp.ne.s32.totalorder %s58, %s72
      %p74 = scmp.eq.s32.totalorder %s27, 0
      %p75 = por %p73, %p74
      %s77 = sadd.s32 %s76, 1
      %p80 = scmp.eq.s32.totalorder %s21, 1
      %p81 = scmp.ne.s32.totalorder %s76, %s78
      %p82 = scmp.eq.s32.totalorder %s21, 0
      %p83 = por %p81, %p82
      %p84 = scmp.ne.s32.totalorder %s76, %s78
      %p85 = scmp.eq.s32.totalorder %s26, 1
      %p86 = por %p84, %p85
      %p87 = scmp.ne.s32.totalorder %s78, %s79
      %p88 = scmp.eq.s32.totalorder %s26, 0
      %p89 = por %p87, %p88
      %p90 = scmp.ne.s32.totalorder %s78, %s79
      %p91 = scmp.eq.s32.totalorder %s27, 1
      %p92 = por %p90, %p91
      %p94 = scmp.ne.s32.totalorder %s79, %s93
      %p95 = scmp.eq.s32.totalorder %s27, 0
      %p96 = por %p94, %p95
      %s98 = sadd.s32 %s97, 1
      %p101 = scmp.eq.s32.totalorder %s21, 1
      %p102 = scmp.ne.s32.totalorder %s97, %s99
      %p103 = scmp.eq.s32.totalorder %s21, 0
      %p104 = por %p102, %p103
      %p105 = scmp.ne.s32.totalorder %s97, %s99
      %p106 = scmp.eq.s32.totalorder %s26, 1
      %p107 = por %p105, %p106
      %p108 = scmp.ne.s32.totalorder %s99, %s100
      %p109 = scmp.eq.s32.totalorder %s26, 0
      %p110 = por %p108, %p109
      %p111 = scmp.ne.s32.totalorder %s99, %s100
      %p112 = scmp.eq.s32.totalorder %s27, 1
      %p113 = por %p111, %p112
      %p115 = scmp.ne.s32.totalorder %s100, %s114
      %p116 = scmp.eq.s32.totalorder %s27, 0
      %p117 = por %p115, %p116
      %s119 = sadd.s32 %s118, 1
      %p122 = scmp.eq.s32.totalorder %s21, 1
      %p123 = scmp.ne.s32.totalorder %s118, %s120
      %p124 = scmp.eq.s32.totalorder %s21, 0
      %p125 = por %p123, %p124
      %p126 = scmp.ne.s32.totalorder %s118, %s120
      %p127 = scmp.eq.s32.totalorder %s26, 1
      %p128 = por %p126, %p127
      %p129 = scmp.ne.s32.totalorder %s120, %s121
      %p130 = scmp.eq.s32.totalorder %s26, 0
      %p131 = por %p129, %p130
      %p132 = scmp.ne.s32.totalorder %s120, %s121
      %p133 = scmp.eq.s32.totalorder %s27, 1
      %p134 = por %p132, %p133
      %p136 = scmp.ne.s32.totalorder %s121, %s135
      %p137 = scmp.eq.s32.totalorder %s27, 0
      %p138 = por %p136, %p137
      %s140 = sadd.s32 %s139, 1
      %p143 = scmp.eq.s32.totalorder %s21, 1
      %p144 = scmp.ne.s32.totalorder %s139, %s141
      %p145 = scmp.eq.s32.totalorder %s21, 0
      %p146 = por %p144, %p145
      %p147 = scmp.ne.s32.totalorder %s139, %s141
      %p148 = scmp.eq.s32.totalorder %s26, 1
      %p149 = por %p147, %p148
      %p150 = scmp.ne.s32.totalorder %s141, %s142
      %p151 = scmp.eq.s32.totalorder %s26, 0
      %p152 = por %p150, %p151
      %p153 = scmp.ne.s32.totalorder %s141, %s142
      %p154 = scmp.eq.s32.totalorder %s27, 1
      %p155 = por %p153, %p154
      %p157 = scmp.ne.s32.totalorder %s142, %s156
      %p158 = scmp.eq.s32.totalorder %s27, 0
      %p159 = por %p157, %p158
      %s161 = sadd.s32 %s160, 1
      %p164 = scmp.eq.s32.totalorder %s21, 1
      %p165 = scmp.ne.s32.totalorder %s160, %s162
      %p166 = scmp.eq.s32.totalorder %s21, 0
      %p167 = por %p165, %p166
      %p168 = scmp.ne.s32.totalorder %s160, %s162
      %p169 = scmp.eq.s32.totalorder %s26, 1
      %p170 = por %p168, %p169
      %p171 = scmp.ne.s32.totalorder %s162, %s163
      %p172 = scmp.eq.s32.totalorder %s26, 0
      %p173 = por %p171, %p172
      %p174 = scmp.ne.s32.totalorder %s162, %s163
      %p175 = scmp.eq.s32.totalorder %s27, 1
      %p176 = por %p174, %p175
      %p178 = scmp.ne.s32.totalorder %s163, %s177
      %p179 = scmp.eq.s32.totalorder %s27, 0
      %p180 = por %p178, %p179
      %s181 = ssub.s32 %s21, %s28
      %p182 = scmp.eq.s32.totalorder %s181, 0
      %s184 = sadd.s32 %s183, 1
      %s185 = scalar_select %p182, %s183, %s184
      %p188 = pneg %p182
      %p189 = scmp.eq.s32.totalorder %s21, 1
      %p190 = por %p188, %p189
      %p191 = scmp.ne.s32.totalorder %s183, %s186
      %p192 = scmp.eq.s32.totalorder %s21, 0
      %p193 = por %p191, %p192
      %p194 = scmp.ne.s32.totalorder %s183, %s186
      %p195 = scmp.eq.s32.totalorder %s26, 1
      %p196 = por %p194, %p195
      %p197 = scmp.ne.s32.totalorder %s186, %s187
      %p198 = scmp.eq.s32.totalorder %s26, 0
      %p199 = por %p197, %p198
      %p200 = scmp.ne.s32.totalorder %s186, %s187
      %p201 = scmp.eq.s32.totalorder %s27, 1
      %p202 = por %p200, %p201
      %p204 = scmp.ne.s32.totalorder %s187, %s203
      %p205 = scmp.eq.s32.totalorder %s27, 0
      %p206 = por %p204, %p205
      %p207 = scmp.le.s32.totalorder 1, %s21
      %p208 = scmp.lt.s32.totalorder %s21, 3
      %p209 = pnand %p207, %p208
      %p210 = pneg %p209
      // Predicated region
      $region9: #{tpu_custom_call.1} parent=5 // pred_check
        _
      $region10: #{tpu_custom_call.1} parent=5 // pred_check_branch
        %212 = sbr.rel (%p209) target = $region12
      $region11: #{tpu_custom_call.1} parent=5 // pred_region
        %s213 = ssub.s32 %s21, 1
        // Predicated region
        $region13: #{tpu_custom_call.1} parent=11 // pred_check
          %p214 = pneg %p68
        $region14: #{tpu_custom_call.1} parent=11 // pred_check_branch
          %216 = sbr.rel (%p214) target = $region16
        $region15: #{tpu_custom_call.1} parent=11 // pred_region
          %s218 = ssub.s32 2048, 2048
          %219 = vsyncadd [#allocation7], %s218
          %s220 = sshll.u32 [#allocation6], 4
          %s221 = int_to_ptr.vmem [resolvable:$true] %s220
          %226 = dma.hbm_to_vmem [thread:$0]  %s1, 2048, %s221, [#allocation7], 128, 128, 8
        $region16: #{tpu_custom_call.1} parent=11 // pred_fallthru
          _
        // Predicated region
        $region17: #{tpu_custom_call.1} parent=11 // pred_check
          %p227 = pneg %p89
        $region18: #{tpu_custom_call.1} parent=11 // pred_check_branch
          %229 = sbr.rel (%p227) target = $region20
        $region19: #{tpu_custom_call.1} parent=11 // pred_region
          _
        $region20: #{tpu_custom_call.1} parent=11 // pred_fallthru
          _
        // Predicated region
        $region21: #{tpu_custom_call.1} parent=11 // pred_check
          %p230 = pneg %p110
        $region22: #{tpu_custom_call.1} parent=11 // pred_check_branch
          %232 = sbr.rel (%p230) target = $region24
        $region23: #{tpu_custom_call.1} parent=11 // pred_region
          %s234 = ssub.s32 2048, 2048
          %235 = vsyncadd [#allocation7], %s234
          %s236 = sshll.u32 [#allocation8], 4
          %s237 = int_to_ptr.vmem [resolvable:$true] %s236
          %242 = dma.hbm_to_vmem [thread:$0]  %s3, 2048, %s237, [#allocation7], 64, 64, 4
        $region24: #{tpu_custom_call.1} parent=11 // pred_fallthru
          _
        // Predicated region
        $region25: #{tpu_custom_call.1} parent=11 // pred_check
          %p243 = pneg %p131
        $region26: #{tpu_custom_call.1} parent=11 // pred_check_branch
          %245 = sbr.rel (%p243) target = $region28
        $region27: #{tpu_custom_call.1} parent=11 // pred_region
          _
        $region28: #{tpu_custom_call.1} parent=11 // pred_fallthru
          _
        // Predicated region
        $region29: #{tpu_custom_call.1} parent=11 // pred_check
          %p246 = pneg %p152
        $region30: #{tpu_custom_call.1} parent=11 // pred_check_branch
          %248 = sbr.rel (%p246) target = $region32
        $region31: #{tpu_custom_call.1} parent=11 // pred_region
          _
        $region32: #{tpu_custom_call.1} parent=11 // pred_fallthru
          _
        // Predicated region
        $region33: #{tpu_custom_call.1} parent=11 // pred_check
          %p249 = pneg %p173
        $region34: #{tpu_custom_call.1} parent=11 // pred_check_branch
          %251 = sbr.rel (%p249) target = $region36
        $region35: #{tpu_custom_call.1} parent=11 // pred_region
          %s253 = ssub.s32 16, 16
          %254 = vsyncadd [#allocation5], %s253
          %s256 = sshll.u32 %s6, 4
          %s257 = int_to_ptr.vmem [resolvable:$true] %s256
          %259 = dma.vmem_to_smem %s257, 16, [#allocation9], [#allocation5]
        $region36: #{tpu_custom_call.1} parent=11 // pred_fallthru
          _
      $region12: #{tpu_custom_call.1} parent=5 // pred_fallthru
        _
      %p260 = scmp.lt.s32.totalorder %s21, 2
      // Predicated region
      $region37: #{tpu_custom_call.1} parent=5 // pred_check
        %p261 = pneg %p260
      $region38: #{tpu_custom_call.1} parent=5 // pred_check_branch
        %263 = sbr.rel (%p261) target = $region40
      $region39: #{tpu_custom_call.1} parent=5 // pred_region
        // Predicated region
        $region41: #{tpu_custom_call.1} parent=39 // pred_check
          %p264 = pneg %p41
        $region42: #{tpu_custom_call.1} parent=39 // pred_check_branch
          %266 = sbr.rel (%p264) target = $region44
        $region43: #{tpu_custom_call.1} parent=39 // pred_region
          %s267 = sand.u32 %s31, 1
          %s268 = scalar_lea.sflag [#allocation3], %s267
          %s269 = sand.u32 %s31, 1
          %s270 = smul.addr %s269, 64
          %s271 = scalar_lea.vmem [#allocation2], %s270
          %s272 = smul.u32 16, %s21
          %s274 = ssub.s32 1024, 1024
          %275 = vsyncadd %s268, %s274
          %s276 = smul.addr %s272, 64
          %s277 = scalar_lea.hbm %s0, %s276
          %s278 = sshll.u32 %s271, 4
          %s279 = int_to_ptr.vmem [resolvable:$true] %s278
          %284 = dma.hbm_to_vmem [thread:$0]  %s277, 1024, %s279, %s268, 64, 64, 4
        $region44: #{tpu_custom_call.1} parent=39 // pred_fallthru
          _
      $region40: #{tpu_custom_call.1} parent=5 // pred_fallthru
        _
      %p285 = scmp.le.s32.totalorder 1, %s21
      %p286 = scmp.lt.s32.totalorder %s21, 3
      %p287 = pnand %p285, %p286
      %p288 = pneg %p287
      // Predicated region
      $region45: #{tpu_custom_call.1} parent=5 // pred_check
        _
      $region46: #{tpu_custom_call.1} parent=5 // pred_check_branch
        %290 = sbr.rel (%p287) target = $region48
      $region47: #{tpu_custom_call.1} parent=5 // pred_region
        %s291 = ssub.s32 %s21, 1
        %s292 = sand.u32 %s34, 1
        %s293 = scalar_lea.sflag [#allocation3], %s292
        %s294 = sand.u32 %s34, 1
        %s295 = smul.addr %s294, 64
        %s296 = scalar_lea.vmem [#allocation2], %s295
        // Predicated region
        $region49: #{tpu_custom_call.1} parent=47 // pred_check
          %p297 = pneg %p47
        $region50: #{tpu_custom_call.1} parent=47 // pred_check_branch
          %299 = sbr.rel (%p297) target = $region52
        $region51: #{tpu_custom_call.1} parent=47 // pred_region
          %300 = dma.done %s293, 1024
        $region52: #{tpu_custom_call.1} parent=47 // pred_fallthru
          _
        // Predicated region
        $region53: #{tpu_custom_call.1} parent=47 // pred_check
          %p301 = pneg %p68
        $region54: #{tpu_custom_call.1} parent=47 // pred_check_branch
          %303 = sbr.rel (%p301) target = $region56
        $region55: #{tpu_custom_call.1} parent=47 // pred_region
          %304 = dma.done [#allocation7], 2048
        $region56: #{tpu_custom_call.1} parent=47 // pred_fallthru
          _
        // Predicated region
        $region57: #{tpu_custom_call.1} parent=47 // pred_check
          %p305 = pneg %p110
        $region58: #{tpu_custom_call.1} parent=47 // pred_check_branch
          %307 = sbr.rel (%p305) target = $region60
        $region59: #{tpu_custom_call.1} parent=47 // pred_region
          %308 = dma.done [#allocation7], 2048
        $region60: #{tpu_custom_call.1} parent=47 // pred_fallthru
          _
        // Predicated region
        $region61: #{tpu_custom_call.1} parent=47 // pred_check
          %p309 = pneg %p173
        $region62: #{tpu_custom_call.1} parent=47 // pred_check_branch
          %311 = sbr.rel (%p309) target = $region64
        $region63: #{tpu_custom_call.1} parent=47 // pred_region
          %312 = dma.done [#allocation5], 16
        $region64: #{tpu_custom_call.1} parent=47 // pred_fallthru
          _
        %313 = sfence
        %s314 = sand.u32 %s34, 1
        %s315 = scalar_lea.sflag [#allocation3], %s314
        %s316 = sand.u32 %s34, 1
        %s317 = smul.addr %s316, 64
        %s318 = scalar_lea.vmem [#allocation2], %s317
        %p319 = pneg %p47
        %p320 = pneg %p44
        %p321 = pneg %p68
        %p322 = pneg %p65
        %p323 = pneg %p89
        %p324 = pneg %p86
        %p325 = pneg %p110
        %p326 = pneg %p107
        %p327 = pneg %p131
        %p328 = pneg %p128
        %p329 = pneg %p152
        %p330 = pneg %p149
        %p331 = pneg %p173
        %p332 = pneg %p170
        %p333 = pneg %p199
        %p334 = pneg %p196
        %s335 = sand.u32 %s186, 1
        %s336 = scalar_lea.sflag [#allocation4], %s335
        %s337 = sand.u32 %s186, 1
        %s338 = smul.addr %s337, 2
        %s339 = scalar_lea.vmem [#allocation10], %s338
        %s340 = smul.u32 16, %s26
        %v342 = vld [vmem:[%s296] sm:$0xf]
        %v343 = vld [vmem:[%s296 + $0x4] sm:$0xf]
        %v344 = vld [vmem:[%s296 + $0x8] sm:$0xf]
        %v345 = vld [vmem:[%s296 + $0xc] sm:$0xf]
        %v346 = vld [vmem:[%s296 + $0x10] sm:$0xf]
        %v347 = vld [vmem:[%s296 + $0x14] sm:$0xf]
        %v348 = vld [vmem:[%s296 + $0x18] sm:$0xf]
        %v349 = vld [vmem:[%s296 + $0x1c] sm:$0xf]
        %v350 = vld [vmem:[%s296 + $0x20] sm:$0xf]
        %v351 = vld [vmem:[%s296 + $0x24] sm:$0xf]
        %v352 = vld [vmem:[%s296 + $0x28] sm:$0xf]
        %v353 = vld [vmem:[%s296 + $0x2c] sm:$0xf]
        %v354 = vld [vmem:[%s296 + $0x30] sm:$0xf]
        %v355 = vld [vmem:[%s296 + $0x34] sm:$0xf]
        %v356 = vld [vmem:[%s296 + $0x38] sm:$0xf]
        %v357 = vld [vmem:[%s296 + $0x3c] sm:$0xf]
        %v358 = vld [vmem:[#allocation6] sm:$0xff]
        %v359 = vld [vmem:[#allocation6 + $0x8] sm:$0xff]
        %v360 = vld [vmem:[#allocation6 + $0x10] sm:$0xff]
        %v361 = vld [vmem:[#allocation6 + $0x18] sm:$0xff]
        %v362 = vld [vmem:[#allocation6 + $0x20] sm:$0xff]
        %v363 = vld [vmem:[#allocation6 + $0x28] sm:$0xff]
        %v364 = vld [vmem:[#allocation6 + $0x30] sm:$0xff]
        %v365 = vld [vmem:[#allocation6 + $0x38] sm:$0xff]
        %v366 = vld [vmem:[#allocation6 + $0x40] sm:$0xff]
        %v367 = vld [vmem:[#allocation6 + $0x48] sm:$0xff]
        %v368 = vld [vmem:[#allocation6 + $0x50] sm:$0xff]
        %v369 = vld [vmem:[#allocation6 + $0x58] sm:$0xff]
        %v370 = vld [vmem:[#allocation6 + $0x60] sm:$0xff]
        %v371 = vld [vmem:[#allocation6 + $0x68] sm:$0xff]
        %v372 = vld [vmem:[#allocation6 + $0x70] sm:$0xff]
        %v373 = vld [vmem:[#allocation6 + $0x78] sm:$0xff]
        %v374 = vld [vmem:[%s2] sm:$0x3]
        %v376 = vlaneseq
        %v377 = vshrl.u32 %v376, 7
        %v378 = vsub.s32 0, %v377
        %v379 = vrot.slane %v374, %v378
        %v380 = vlaneseq
        %v381 = vshrl.u32 %v380, 7
        %v382 = vsub.s32 1, %v381
        %v383 = vrot.slane %v374, %v382
        %v402 = vunpack.c.l.b16 %v342
        %v403 = vunpack.c.l.b16 %v343
        %v404 = vunpack.c.l.b16 %v344
        %v405 = vunpack.c.l.b16 %v345
        %v406 = vunpack.c.l.b16 %v346
        %v407 = vunpack.c.l.b16 %v347
        %v408 = vunpack.c.l.b16 %v348
        %v409 = vunpack.c.l.b16 %v349
        %v410 = vunpack.c.l.b16 %v350
        %v411 = vunpack.c.l.b16 %v351
        %v412 = vunpack.c.l.b16 %v352
        %v413 = vunpack.c.l.b16 %v353
        %v414 = vunpack.c.l.b16 %v354
        %v415 = vunpack.c.l.b16 %v355
        %v416 = vunpack.c.l.b16 %v356
        %v417 = vunpack.c.l.b16 %v357
        %v418 = vpack.c.b16 %v403, %v402
        %v419 = vpack.c.b16 %v405, %v404
        %v420 = vpack.c.b16 %v407, %v406
        %v421 = vpack.c.b16 %v409, %v408
        %v422 = vpack.c.b16 %v411, %v410
        %v423 = vpack.c.b16 %v413, %v412
        %v424 = vpack.c.b16 %v415, %v414
        %v425 = vpack.c.b16 %v417, %v416
        %v450 = vunpack.c.l.b16 %v358
        %v451 = vunpack.c.h.b16 %v358
        %v452 = vunpack.c.l.b16 %v359
        %v453 = vunpack.c.h.b16 %v359
        %v454 = vunpack.c.l.b16 %v360
        %v455 = vunpack.c.h.b16 %v360
        %v456 = vunpack.c.l.b16 %v361
        %v457 = vunpack.c.h.b16 %v361
        %v458 = vunpack.c.l.b16 %v362
        %v459 = vunpack.c.h.b16 %v362
        %v460 = vunpack.c.l.b16 %v363
        %v461 = vunpack.c.h.b16 %v363
        %v462 = vunpack.c.l.b16 %v364
        %v463 = vunpack.c.h.b16 %v364
        %v464 = vunpack.c.l.b16 %v365
        %v465 = vunpack.c.h.b16 %v365
        %v466 = vunpack.c.l.b16 %v366
        %v467 = vunpack.c.h.b16 %v366
        %v468 = vunpack.c.l.b16 %v367
        %v469 = vunpack.c.h.b16 %v367
        %v470 = vunpack.c.l.b16 %v368
        %v471 = vunpack.c.h.b16 %v368
        %v472 = vunpack.c.l.b16 %v369
        %v473 = vunpack.c.h.b16 %v369
        %v474 = vunpack.c.l.b16 %v370
        %v475 = vunpack.c.h.b16 %v370
        %v476 = vunpack.c.l.b16 %v371
        %v477 = vunpack.c.h.b16 %v371
        %v478 = vunpack.c.l.b16 %v372
        %v479 = vunpack.c.h.b16 %v372
        %v480 = vunpack.c.l.b16 %v373
        %v481 = vunpack.c.h.b16 %v373
        %v482 = vpack.c.b16 %v452, %v450
        %v483 = vpack.c.b16 %v453, %v451
        %v484 = vpack.c.b16 %v456, %v454
        %v485 = vpack.c.b16 %v457, %v455
        %v486 = vpack.c.b16 %v460, %v458
        %v487 = vpack.c.b16 %v461, %v459
        %v488 = vpack.c.b16 %v464, %v462
        %v489 = vpack.c.b16 %v465, %v463
        %v490 = vpack.c.b16 %v468, %v466
        %v491 = vpack.c.b16 %v469, %v467
        %v492 = vpack.c.b16 %v472, %v470
        %v493 = vpack.c.b16 %v473, %v471
        %v494 = vpack.c.b16 %v476, %v474
        %v495 = vpack.c.b16 %v477, %v475
        %v496 = vpack.c.b16 %v480, %v478
        %v497 = vpack.c.b16 %v481, %v479
        %514 = vmatprep.subr.bf16.mxu0 %v483
        %515 = vmatpush1.bf16.msra.mxu0 %v482
        %516 = vmatprep.subr.bf16.mxu0 %v485
        %517 = vmatpush1.bf16.msra.mxu0 %v484
        %518 = vmatprep.subr.bf16.mxu0 %v487
        %519 = vmatpush1.bf16.msra.mxu0 %v486
        %520 = vmatprep.subr.bf16.mxu0 %v489
        %521 = vmatpush1.bf16.msra.mxu0 %v488
        %522 = vmatprep.subr.bf16.mxu0 %v491
        %523 = vmatpush1.bf16.msra.mxu0 %v490
        %524 = vmatprep.subr.bf16.mxu0 %v493
        %525 = vmatpush1.bf16.msra.mxu0 %v492
        %526 = vmatprep.subr.bf16.mxu0 %v495
        %527 = vmatpush1.bf16.msra.mxu0 %v494
        %528 = vmatprep.subr.bf16.mxu0 %v497
        %529 = vmatpush1.bf16.msra.mxu0 %v496
        %530 = vmatprep.subr.bf16.mxu0 0
        %531 = vmatpush1.bf16.msra.mxu0 0
        %532 = vmatprep.subr.bf16.mxu0 0
        %533 = vmatpush1.bf16.msra.mxu0 0
        %534 = vmatprep.subr.bf16.mxu0 0
        %535 = vmatpush1.bf16.msra.mxu0 0
        %536 = vmatprep.subr.bf16.mxu0 0
        %537 = vmatpush1.bf16.msra.mxu0 0
        %538 = vmatprep.subr.bf16.mxu0 0
        %539 = vmatpush1.bf16.msra.mxu0 0
        %540 = vmatprep.subr.bf16.mxu0 0
        %541 = vmatpush1.bf16.msra.mxu0 0
        %542 = vmatprep.subr.bf16.mxu0 0
        %543 = vmatpush1.bf16.msra.mxu0 0
        %544 = vmatprep.subr.bf16.mxu0 0
        %545 = vmatpush1.bf16.msra.mxu0 0
        %546 = vmatprep.mubr.bf16.mxu0 0
        %547 = vmatmul.mubr.bf16.gmra.mrb[0].mxu0 %v418
        %v548 = vpop.f32.mrb[0].mxu0
        %v549 = vadd.f32 %v379, %v548
        %v550 = vpop.f32.mrb[0].mxu0
        %v551 = vadd.f32 %v383, %v550
        %v552 = vpop.f32.mrb[0].mxu0
        %v553 = vadd.f32 %v379, %v552
        %v554 = vpop.f32.mrb[0].mxu0
        %v555 = vadd.f32 %v383, %v554
        %556 = vmatprep.mubr.bf16.mxu0 0
        %557 = vmatmul.mubr.bf16.gmra.mrb[0].mxu0 %v419
        %v558 = vpop.f32.mrb[0].mxu0
        %v559 = vadd.f32 %v379, %v558
        %v560 = vpop.f32.mrb[0].mxu0
        %v561 = vadd.f32 %v383, %v560
        %v562 = vpop.f32.mrb[0].mxu0
        %v563 = vadd.f32 %v379, %v562
        %v564 = vpop.f32.mrb[0].mxu0
        %v565 = vadd.f32 %v383, %v564
        %566 = vmatprep.mubr.bf16.mxu0 0
        %567 = vmatmul.mubr.bf16.gmra.mrb[0].mxu0 %v420
        %v568 = vpop.f32.mrb[0].mxu0
        %v569 = vadd.f32 %v379, %v568
        %v570 = vpop.f32.mrb[0].mxu0
        %v571 = vadd.f32 %v383, %v570
        %v572 = vpop.f32.mrb[0].mxu0
        %v573 = vadd.f32 %v379, %v572
        %v574 = vpop.f32.mrb[0].mxu0
        %v575 = vadd.f32 %v383, %v574
        %576 = vmatprep.mubr.bf16.mxu0 0
        %577 = vmatmul.mubr.bf16.gmra.mrb[0].mxu0 %v421
        %v578 = vpop.f32.mrb[0].mxu0
        %v579 = vadd.f32 %v379, %v578
        %v580 = vpop.f32.mrb[0].mxu0
        %v581 = vadd.f32 %v383, %v580
        %v582 = vpop.f32.mrb[0].mxu0
        %v583 = vadd.f32 %v379, %v582
        %v584 = vpop.f32.mrb[0].mxu0
        %v585 = vadd.f32 %v383, %v584
        %586 = vmatprep.mubr.bf16.mxu0 0
        %587 = vmatmul.mubr.bf16.gmra.mrb[0].mxu0 %v422
        %v588 = vpop.f32.mrb[0].mxu0
        %v589 = vadd.f32 %v379, %v588
        %v590 = vpop.f32.mrb[0].mxu0
        %v591 = vadd.f32 %v383, %v590
        %v592 = vpop.f32.mrb[0].mxu0
        %v593 = vadd.f32 %v379, %v592
        %v594 = vpop.f32.mrb[0].mxu0
        %v595 = vadd.f32 %v383, %v594
        %596 = vmatprep.mubr.bf16.mxu0 0
        %597 = vmatmul.mubr.bf16.gmra.mrb[0].mxu0 %v423
        %v598 = vpop.f32.mrb[0].mxu0
        %v599 = vadd.f32 %v379, %v598
        %v600 = vpop.f32.mrb[0].mxu0
        %v601 = vadd.f32 %v383, %v600
        %v602 = vpop.f32.mrb[0].mxu0
        %v603 = vadd.f32 %v379, %v602
        %v604 = vpop.f32.mrb[0].mxu0
        %v605 = vadd.f32 %v383, %v604
        %606 = vmatprep.mubr.bf16.mxu0 0
        %607 = vmatmul.mubr.bf16.gmra.mrb[0].mxu0 %v424
        %v608 = vpop.f32.mrb[0].mxu0
        %v609 = vadd.f32 %v379, %v608
        %v610 = vpop.f32.mrb[0].mxu0
        %v611 = vadd.f32 %v383, %v610
        %v612 = vpop.f32.mrb[0].mxu0
        %v613 = vadd.f32 %v379, %v612
        %v614 = vpop.f32.mrb[0].mxu0
        %v615 = vadd.f32 %v383, %v614
        %616 = vmatprep.mubr.bf16.mxu0 0
        %617 = vmatmul.mubr.bf16.gmra.mrb[0].mxu0 %v425
        %v618 = vpop.f32.mrb[0].mxu0
        %v619 = vadd.f32 %v379, %v618
        %v620 = vpop.f32.mrb[0].mxu0
        %v621 = vadd.f32 %v383, %v620
        %v622 = vpop.f32.mrb[0].mxu0
        %v623 = vadd.f32 %v379, %v622
        %v624 = vpop.f32.mrb[0].mxu0
        %v625 = vadd.f32 %v383, %v624
        %626 = vdwg.mxu0
        %v627 = vmax.f32 %v549, 0.0
        %v628 = vmax.f32 %v551, 0.0
        %v629 = vmax.f32 %v553, 0.0
        %v630 = vmax.f32 %v555, 0.0
        %v631 = vmax.f32 %v559, 0.0
        %v632 = vmax.f32 %v561, 0.0
        %v633 = vmax.f32 %v563, 0.0
        %v634 = vmax.f32 %v565, 0.0
        %v635 = vmax.f32 %v569, 0.0
        %v636 = vmax.f32 %v571, 0.0
        %v637 = vmax.f32 %v573, 0.0
        %v638 = vmax.f32 %v575, 0.0
        %v639 = vmax.f32 %v579, 0.0
        %v640 = vmax.f32 %v581, 0.0
        %v641 = vmax.f32 %v583, 0.0
        %v642 = vmax.f32 %v585, 0.0
        %v643 = vmax.f32 %v589, 0.0
        %v644 = vmax.f32 %v591, 0.0
        %v645 = vmax.f32 %v593, 0.0
        %v646 = vmax.f32 %v595, 0.0
        %v647 = vmax.f32 %v599, 0.0
        %v648 = vmax.f32 %v601, 0.0
        %v649 = vmax.f32 %v603, 0.0
        %v650 = vmax.f32 %v605, 0.0
        %v651 = vmax.f32 %v609, 0.0
        %v652 = vmax.f32 %v611, 0.0
        %v653 = vmax.f32 %v613, 0.0
        %v654 = vmax.f32 %v615, 0.0
        %v655 = vmax.f32 %v619, 0.0
        %v656 = vmax.f32 %v621, 0.0
        %v657 = vmax.f32 %v623, 0.0
        %v658 = vmax.f32 %v625, 0.0
        %v659 = vpack.c.bf16 %v629, %v627
        %v660 = vpack.c.bf16 %v630, %v628
        %v661 = vpack.c.bf16 %v633, %v631
        %v662 = vpack.c.bf16 %v634, %v632
        %v663 = vpack.c.bf16 %v637, %v635
        %v664 = vpack.c.bf16 %v638, %v636
        %v665 = vpack.c.bf16 %v641, %v639
        %v666 = vpack.c.bf16 %v642, %v640
        %v667 = vpack.c.bf16 %v645, %v643
        %v668 = vpack.c.bf16 %v646, %v644
        %v669 = vpack.c.bf16 %v649, %v647
        %v670 = vpack.c.bf16 %v650, %v648
        %v671 = vpack.c.bf16 %v653, %v651
        %v672 = vpack.c.bf16 %v654, %v652
        %v673 = vpack.c.bf16 %v657, %v655
        %v674 = vpack.c.bf16 %v658, %v656
        %v675 = vld [vmem:[#allocation8] sm:$0xf]
        %v676 = vld [vmem:[#allocation8 + $0x4] sm:$0xf]
        %v677 = vld [vmem:[#allocation8 + $0x8] sm:$0xf]
        %v678 = vld [vmem:[#allocation8 + $0xc] sm:$0xf]
        %v679 = vld [vmem:[#allocation8 + $0x10] sm:$0xf]
        %v680 = vld [vmem:[#allocation8 + $0x14] sm:$0xf]
        %v681 = vld [vmem:[#allocation8 + $0x18] sm:$0xf]
        %v682 = vld [vmem:[#allocation8 + $0x1c] sm:$0xf]
        %v683 = vld [vmem:[#allocation8 + $0x20] sm:$0xf]
        %v684 = vld [vmem:[#allocation8 + $0x24] sm:$0xf]
        %v685 = vld [vmem:[#allocation8 + $0x28] sm:$0xf]
        %v686 = vld [vmem:[#allocation8 + $0x2c] sm:$0xf]
        %v687 = vld [vmem:[#allocation8 + $0x30] sm:$0xf]
        %v688 = vld [vmem:[#allocation8 + $0x34] sm:$0xf]
        %v689 = vld [vmem:[#allocation8 + $0x38] sm:$0xf]
        %v690 = vld [vmem:[#allocation8 + $0x3c] sm:$0xf]
        %v691 = vld [vmem:[%s4] sm:$0x1]
        %v692 = vlaneseq
        %v693 = vshrl.u32 %v692, 7
        %v694 = vsub.s32 0, %v693
        %v695 = vrot.slane %v691, %v694
        %v712 = vunpack.c.l.b16 %v675
        %v713 = vunpack.c.l.b16 %v676
        %v714 = vunpack.c.l.b16 %v677
        %v715 = vunpack.c.l.b16 %v678
        %v716 = vunpack.c.l.b16 %v679
        %v717 = vunpack.c.l.b16 %v680
        %v718 = vunpack.c.l.b16 %v681
        %v719 = vunpack.c.l.b16 %v682
        %v720 = vunpack.c.l.b16 %v683
        %v721 = vunpack.c.l.b16 %v684
        %v722 = vunpack.c.l.b16 %v685
        %v723 = vunpack.c.l.b16 %v686
        %v724 = vunpack.c.l.b16 %v687
        %v725 = vunpack.c.l.b16 %v688
        %v726 = vunpack.c.l.b16 %v689
        %v727 = vunpack.c.l.b16 %v690
        %v728 = vpack.c.b16 %v713, %v712
        %v729 = vpack.c.b16 %v715, %v714
        %v730 = vpack.c.b16 %v717, %v716
        %v731 = vpack.c.b16 %v719, %v718
        %v732 = vpack.c.b16 %v721, %v720
        %v733 = vpack.c.b16 %v723, %v722
        %v734 = vpack.c.b16 %v725, %v724
        %v735 = vpack.c.b16 %v727, %v726
        %744 = vmatprep.subr.bf16.mxu0 0
        %745 = vmatpush1.bf16.msra.mxu0 %v728
        %746 = vmatprep.subr.bf16.mxu0 0
        %747 = vmatpush1.bf16.msra.mxu0 %v729
        %748 = vmatprep.subr.bf16.mxu0 0
        %749 = vmatpush1.bf16.msra.mxu0 %v730
        %750 = vmatprep.subr.bf16.mxu0 0
        %751 = vmatpush1.bf16.msra.mxu0 %v731
        %752 = vmatprep.subr.bf16.mxu0 0
        %753 = vmatpush1.bf16.msra.mxu0 %v732
        %754 = vmatprep.subr.bf16.mxu0 0
        %755 = vmatpush1.bf16.msra.mxu0 %v733
        %756 = vmatprep.subr.bf16.mxu0 0
        %757 = vmatpush1.bf16.msra.mxu0 %v734
        %758 = vmatprep.subr.bf16.mxu0 0
        %759 = vmatpush1.bf16.msra.mxu0 %v735
        %760 = vmatprep.subr.bf16.mxu0 0
        %761 = vmatpush1.bf16.msra.mxu0 0
        %762 = vmatprep.subr.bf16.mxu0 0
        %763 = vmatpush1.bf16.msra.mxu0 0
        %764 = vmatprep.subr.bf16.mxu0 0
        %765 = vmatpush1.bf16.msra.mxu0 0
        %766 = vmatprep.subr.bf16.mxu0 0
        %767 = vmatpush1.bf16.msra.mxu0 0
        %768 = vmatprep.subr.bf16.mxu0 0
        %769 = vmatpush1.bf16.msra.mxu0 0
        %770 = vmatprep.subr.bf16.mxu0 0
        %771 = vmatpush1.bf16.msra.mxu0 0
        %772 = vmatprep.subr.bf16.mxu0 0
        %773 = vmatpush1.bf16.msra.mxu0 0
        %774 = vmatprep.subr.bf16.mxu0 0
        %775 = vmatpush1.bf16.msra.mxu0 0
        %776 = vmatprep.mubr.bf16.mxu0 0
        %777 = vmatmul.mubr.bf16.gmra.mrb[0].mxu0 %v659
        %v778 = vpop.f32.mrb[0].mxu0
        %v779 = vadd.f32 %v695, %v778
        %v780 = vpop.f32.mrb[0].mxu0
        %v781 = vpop.f32.mrb[0].mxu0
        %v782 = vadd.f32 %v695, %v781
        %v783 = vpop.f32.mrb[0].mxu0
        %784 = vmatprep.mubr.bf16.mxu0 0
        %785 = vmatmul.mubr.bf16.gmra.mrb[0].mxu0 %v661
        %v786 = vpop.f32.mrb[0].mxu0
        %v787 = vadd.f32 %v695, %v786
        %v788 = vpop.f32.mrb[0].mxu0
        %v789 = vpop.f32.mrb[0].mxu0
        %v790 = vadd.f32 %v695, %v789
        %v791 = vpop.f32.mrb[0].mxu0
        %792 = vmatprep.mubr.bf16.mxu0 0
        %793 = vmatmul.mubr.bf16.gmra.mrb[0].mxu0 %v663
        %v794 = vpop.f32.mrb[0].mxu0
        %v795 = vadd.f32 %v695, %v794
        %v796 = vpop.f32.mrb[0].mxu0
        %v797 = vpop.f32.mrb[0].mxu0
        %v798 = vadd.f32 %v695, %v797
        %v799 = vpop.f32.mrb[0].mxu0
        %800 = vmatprep.mubr.bf16.mxu0 0
        %801 = vmatmul.mubr.bf16.gmra.mrb[0].mxu0 %v665
        %v802 = vpop.f32.mrb[0].mxu0
        %v803 = vadd.f32 %v695, %v802
        %v804 = vpop.f32.mrb[0].mxu0
        %v805 = vpop.f32.mrb[0].mxu0
        %v806 = vadd.f32 %v695, %v805
        %v807 = vpop.f32.mrb[0].mxu0
        %808 = vmatprep.mubr.bf16.mxu0 0
        %809 = vmatmul.mubr.bf16.gmra.mrb[0].mxu0 %v667
        %v810 = vpop.f32.mrb[0].mxu0
        %v811 = vadd.f32 %v695, %v810
        %v812 = vpop.f32.mrb[0].mxu0
        %v813 = vpop.f32.mrb[0].mxu0
        %v814 = vadd.f32 %v695, %v813
        %v815 = vpop.f32.mrb[0].mxu0
        %816 = vmatprep.mubr.bf16.mxu0 0
        %817 = vmatmul.mubr.bf16.gmra.mrb[0].mxu0 %v669
        %v818 = vpop.f32.mrb[0].mxu0
        %v819 = vadd.f32 %v695, %v818
        %v820 = vpop.f32.mrb[0].mxu0
        %v821 = vpop.f32.mrb[0].mxu0
        %v822 = vadd.f32 %v695, %v821
        %v823 = vpop.f32.mrb[0].mxu0
        %824 = vmatprep.mubr.bf16.mxu0 0
        %825 = vmatmul.mubr.bf16.gmra.mrb[0].mxu0 %v671
        %v826 = vpop.f32.mrb[0].mxu0
        %v827 = vadd.f32 %v695, %v826
        %v828 = vpop.f32.mrb[0].mxu0
        %v829 = vpop.f32.mrb[0].mxu0
        %v830 = vadd.f32 %v695, %v829
        %v831 = vpop.f32.mrb[0].mxu0
        %832 = vmatprep.mubr.bf16.mxu0 0
        %833 = vmatmul.mubr.bf16.gmra.mrb[0].mxu0 %v673
        %v834 = vpop.f32.mrb[0].mxu0
        %v835 = vadd.f32 %v695, %v834
        %v836 = vpop.f32.mrb[0].mxu0
        %v837 = vpop.f32.mrb[0].mxu0
        %v838 = vadd.f32 %v695, %v837
        %v839 = vpop.f32.mrb[0].mxu0
        %840 = vdwg.mxu0
        %v841 = vmax.f32 %v779, 0.0
        %v842 = vmax.f32 %v782, 0.0
        %v843 = vmax.f32 %v787, 0.0
        %v844 = vmax.f32 %v790, 0.0
        %v845 = vmax.f32 %v795, 0.0
        %v846 = vmax.f32 %v798, 0.0
        %v847 = vmax.f32 %v803, 0.0
        %v848 = vmax.f32 %v806, 0.0
        %v849 = vmax.f32 %v811, 0.0
        %v850 = vmax.f32 %v814, 0.0
        %v851 = vmax.f32 %v819, 0.0
        %v852 = vmax.f32 %v822, 0.0
        %v853 = vmax.f32 %v827, 0.0
        %v854 = vmax.f32 %v830, 0.0
        %v855 = vmax.f32 %v835, 0.0
        %v856 = vmax.f32 %v838, 0.0
        %v857 = vld [vmem:[%s5] sm:$0x1]
        %v858 = vunpack.c.l.bf16 %v857
        %v859 = vlaneseq
        %v860 = vshrl.u32 %v859, 7
        %v861 = vsub.s32 0, %v860
        %v862 = vrot.slane %v858, %v861
        %v863 = vmul.f32 %v841, %v862
        %v864 = vmul.f32 %v842, %v862
        %v865 = vmul.f32 %v843, %v862
        %v866 = vmul.f32 %v844, %v862
        %v867 = vmul.f32 %v845, %v862
        %v868 = vmul.f32 %v846, %v862
        %v869 = vmul.f32 %v847, %v862
        %v870 = vmul.f32 %v848, %v862
        %v871 = vmul.f32 %v849, %v862
        %v872 = vmul.f32 %v850, %v862
        %v873 = vmul.f32 %v851, %v862
        %v874 = vmul.f32 %v852, %v862
        %v875 = vmul.f32 %v853, %v862
        %v876 = vmul.f32 %v854, %v862
        %v877 = vmul.f32 %v855, %v862
        %v878 = vmul.f32 %v856, %v862
        %879 = vadd.xlane.f32.xlu0 %v863
        %v880 = vpop.xlane.xlu0 %879
        %881 = vadd.xlane.f32.xlu0 %v864
        %v882 = vpop.xlane.xlu0 %881
        %883 = vadd.xlane.f32.xlu0 %v865
        %v884 = vpop.xlane.xlu0 %883
        %885 = vadd.xlane.f32.xlu0 %v866
        %v886 = vpop.xlane.xlu0 %885
        %887 = vadd.xlane.f32.xlu0 %v867
        %v888 = vpop.xlane.xlu0 %887
        %889 = vadd.xlane.f32.xlu0 %v868
        %v890 = vpop.xlane.xlu0 %889
        %891 = vadd.xlane.f32.xlu0 %v869
        %v892 = vpop.xlane.xlu0 %891
        %893 = vadd.xlane.f32.xlu0 %v870
        %v894 = vpop.xlane.xlu0 %893
        %895 = vadd.xlane.f32.xlu0 %v871
        %v896 = vpop.xlane.xlu0 %895
        %897 = vadd.xlane.f32.xlu0 %v872
        %v898 = vpop.xlane.xlu0 %897
        %899 = vadd.xlane.f32.xlu0 %v873
        %v900 = vpop.xlane.xlu0 %899
        %901 = vadd.xlane.f32.xlu0 %v874
        %v902 = vpop.xlane.xlu0 %901
        %903 = vadd.xlane.f32.xlu0 %v875
        %v904 = vpop.xlane.xlu0 %903
        %905 = vadd.xlane.f32.xlu0 %v876
        %v906 = vpop.xlane.xlu0 %905
        %907 = vadd.xlane.f32.xlu0 %v877
        %v908 = vpop.xlane.xlu0 %907
        %909 = vadd.xlane.f32.xlu0 %v878
        %v910 = vpop.xlane.xlu0 %909
        %s911 = sld [smem:[#allocation9]]
        %v912 = vstv %s911
        %v913 = vadd.f32 %v880, %v912
        %v914 = vadd.f32 %v882, %v912
        %v915 = vadd.f32 %v884, %v912
        %v916 = vadd.f32 %v886, %v912
        %v917 = vadd.f32 %v888, %v912
        %v918 = vadd.f32 %v890, %v912
        %v919 = vadd.f32 %v892, %v912
        %v920 = vadd.f32 %v894, %v912
        %v921 = vadd.f32 %v896, %v912
        %v922 = vadd.f32 %v898, %v912
        %v923 = vadd.f32 %v900, %v912
        %v924 = vadd.f32 %v902, %v912
        %v925 = vadd.f32 %v904, %v912
        %v926 = vadd.f32 %v906, %v912
        %v927 = vadd.f32 %v908, %v912
        %v928 = vadd.f32 %v910, %v912
        %s929 = scalar_lea.vmem [#allocation8], 64
        %v930 = vld [vmem:[%s929] sm:$0xf]
        %v931 = vld [vmem:[%s929 + $0x4] sm:$0xf]
        %v932 = vld [vmem:[%s929 + $0x8] sm:$0xf]
        %v933 = vld [vmem:[%s929 + $0xc] sm:$0xf]
        %v934 = vld [vmem:[%s929 + $0x10] sm:$0xf]
        %v935 = vld [vmem:[%s929 + $0x14] sm:$0xf]
        %v936 = vld [vmem:[%s929 + $0x18] sm:$0xf]
        %v937 = vld [vmem:[%s929 + $0x1c] sm:$0xf]
        %v938 = vld [vmem:[%s929 + $0x20] sm:$0xf]
        %v939 = vld [vmem:[%s929 + $0x24] sm:$0xf]
        %v940 = vld [vmem:[%s929 + $0x28] sm:$0xf]
        %v941 = vld [vmem:[%s929 + $0x2c] sm:$0xf]
        %v942 = vld [vmem:[%s929 + $0x30] sm:$0xf]
        %v943 = vld [vmem:[%s929 + $0x34] sm:$0xf]
        %v944 = vld [vmem:[%s929 + $0x38] sm:$0xf]
        %v945 = vld [vmem:[%s929 + $0x3c] sm:$0xf]
        %v946 = vld [vmem:[%s4 + $0x1] sm:$0x1]
        %v947 = vlaneseq
        %v948 = vshrl.u32 %v947, 7
        %v949 = vsub.s32 0, %v948
        %v950 = vrot.slane %v946, %v949
        %v967 = vunpack.c.l.b16 %v930
        %v968 = vunpack.c.l.b16 %v931
        %v969 = vunpack.c.l.b16 %v932
        %v970 = vunpack.c.l.b16 %v933
        %v971 = vunpack.c.l.b16 %v934
        %v972 = vunpack.c.l.b16 %v935
        %v973 = vunpack.c.l.b16 %v936
        %v974 = vunpack.c.l.b16 %v937
        %v975 = vunpack.c.l.b16 %v938
        %v976 = vunpack.c.l.b16 %v939
        %v977 = vunpack.c.l.b16 %v940
        %v978 = vunpack.c.l.b16 %v941
        %v979 = vunpack.c.l.b16 %v942
        %v980 = vunpack.c.l.b16 %v943
        %v981 = vunpack.c.l.b16 %v944
        %v982 = vunpack.c.l.b16 %v945
        %v983 = vpack.c.b16 %v968, %v967
        %v984 = vpack.c.b16 %v970, %v969
        %v985 = vpack.c.b16 %v972, %v971
        %v986 = vpack.c.b16 %v974, %v973
        %v987 = vpack.c.b16 %v976, %v975
        %v988 = vpack.c.b16 %v978, %v977
        %v989 = vpack.c.b16 %v980, %v979
        %v990 = vpack.c.b16 %v982, %v981
        %999 = vmatprep.subr.bf16.mxu0 0
        %1000 = vmatpush1.bf16.msra.mxu0 %v983
        %1001 = vmatprep.subr.bf16.mxu0 0
        %1002 = vmatpush1.bf16.msra.mxu0 %v984
        %1003 = vmatprep.subr.bf16.mxu0 0
        %1004 = vmatpush1.bf16.msra.mxu0 %v985
        %1005 = vmatprep.subr.bf16.mxu0 0
        %1006 = vmatpush1.bf16.msra.mxu0 %v986
        %1007 = vmatprep.subr.bf16.mxu0 0
        %1008 = vmatpush1.bf16.msra.mxu0 %v987
        %1009 = vmatprep.subr.bf16.mxu0 0
        %1010 = vmatpush1.bf16.msra.mxu0 %v988
        %1011 = vmatprep.subr.bf16.mxu0 0
        %1012 = vmatpush1.bf16.msra.mxu0 %v989
        %1013 = vmatprep.subr.bf16.mxu0 0
        %1014 = vmatpush1.bf16.msra.mxu0 %v990
        %1015 = vmatprep.subr.bf16.mxu0 0
        %1016 = vmatpush1.bf16.msra.mxu0 0
        %1017 = vmatprep.subr.bf16.mxu0 0
        %1018 = vmatpush1.bf16.msra.mxu0 0
        %1019 = vmatprep.subr.bf16.mxu0 0
        %1020 = vmatpush1.bf16.msra.mxu0 0
        %1021 = vmatprep.subr.bf16.mxu0 0
        %1022 = vmatpush1.bf16.msra.mxu0 0
        %1023 = vmatprep.subr.bf16.mxu0 0
        %1024 = vmatpush1.bf16.msra.mxu0 0
        %1025 = vmatprep.subr.bf16.mxu0 0
        %1026 = vmatpush1.bf16.msra.mxu0 0
        %1027 = vmatprep.subr.bf16.mxu0 0
        %1028 = vmatpush1.bf16.msra.mxu0 0
        %1029 = vmatprep.subr.bf16.mxu0 0
        %1030 = vmatpush1.bf16.msra.mxu0 0
        %1031 = vmatprep.mubr.bf16.mxu0 0
        %1032 = vmatmul.mubr.bf16.gmra.mrb[0].mxu0 %v660
        %v1033 = vpop.f32.mrb[0].mxu0
        %v1034 = vadd.f32 %v950, %v1033
        %v1035 = vpop.f32.mrb[0].mxu0
        %v1036 = vpop.f32.mrb[0].mxu0
        %v1037 = vadd.f32 %v950, %v1036
        %v1038 = vpop.f32.mrb[0].mxu0
        %1039 = vmatprep.mubr.bf16.mxu0 0
        %1040 = vmatmul.mubr.bf16.gmra.mrb[0].mxu0 %v662
        %v1041 = vpop.f32.mrb[0].mxu0
        %v1042 = vadd.f32 %v950, %v1041
        %v1043 = vpop.f32.mrb[0].mxu0
        %v1044 = vpop.f32.mrb[0].mxu0
        %v1045 = vadd.f32 %v950, %v1044
        %v1046 = vpop.f32.mrb[0].mxu0
        %1047 = vmatprep.mubr.bf16.mxu0 0
        %1048 = vmatmul.mubr.bf16.gmra.mrb[0].mxu0 %v664
        %v1049 = vpop.f32.mrb[0].mxu0
        %v1050 = vadd.f32 %v950, %v1049
        %v1051 = vpop.f32.mrb[0].mxu0
        %v1052 = vpop.f32.mrb[0].mxu0
        %v1053 = vadd.f32 %v950, %v1052
        %v1054 = vpop.f32.mrb[0].mxu0
        %1055 = vmatprep.mubr.bf16.mxu0 0
        %1056 = vmatmul.mubr.bf16.gmra.mrb[0].mxu0 %v666
        %v1057 = vpop.f32.mrb[0].mxu0
        %v1058 = vadd.f32 %v950, %v1057
        %v1059 = vpop.f32.mrb[0].mxu0
        %v1060 = vpop.f32.mrb[0].mxu0
        %v1061 = vadd.f32 %v950, %v1060
        %v1062 = vpop.f32.mrb[0].mxu0
        %1063 = vmatprep.mubr.bf16.mxu0 0
        %1064 = vmatmul.mubr.bf16.gmra.mrb[0].mxu0 %v668
        %v1065 = vpop.f32.mrb[0].mxu0
        %v1066 = vadd.f32 %v950, %v1065
        %v1067 = vpop.f32.mrb[0].mxu0
        %v1068 = vpop.f32.mrb[0].mxu0
        %v1069 = vadd.f32 %v950, %v1068
        %v1070 = vpop.f32.mrb[0].mxu0
        %1071 = vmatprep.mubr.bf16.mxu0 0
        %1072 = vmatmul.mubr.bf16.gmra.mrb[0].mxu0 %v670
        %v1073 = vpop.f32.mrb[0].mxu0
        %v1074 = vadd.f32 %v950, %v1073
        %v1075 = vpop.f32.mrb[0].mxu0
        %v1076 = vpop.f32.mrb[0].mxu0
        %v1077 = vadd.f32 %v950, %v1076
        %v1078 = vpop.f32.mrb[0].mxu0
        %1079 = vmatprep.mubr.bf16.mxu0 0
        %1080 = vmatmul.mubr.bf16.gmra.mrb[0].mxu0 %v672
        %v1081 = vpop.f32.mrb[0].mxu0
        %v1082 = vadd.f32 %v950, %v1081
        %v1083 = vpop.f32.mrb[0].mxu0
        %v1084 = vpop.f32.mrb[0].mxu0
        %v1085 = vadd.f32 %v950, %v1084
        %v1086 = vpop.f32.mrb[0].mxu0
        %1087 = vmatprep.mubr.bf16.mxu0 0
        %1088 = vmatmul.mubr.bf16.gmra.mrb[0].mxu0 %v674
        %v1089 = vpop.f32.mrb[0].mxu0
        %v1090 = vadd.f32 %v950, %v1089
        %v1091 = vpop.f32.mrb[0].mxu0
        %v1092 = vpop.f32.mrb[0].mxu0
        %v1093 = vadd.f32 %v950, %v1092
        %v1094 = vpop.f32.mrb[0].mxu0
        %1095 = vdwg.mxu0
        %v1096 = vmax.f32 %v1034, 0.0
        %v1097 = vmax.f32 %v1037, 0.0
        %v1098 = vmax.f32 %v1042, 0.0
        %v1099 = vmax.f32 %v1045, 0.0
        %v1100 = vmax.f32 %v1050, 0.0
        %v1101 = vmax.f32 %v1053, 0.0
        %v1102 = vmax.f32 %v1058, 0.0
        %v1103 = vmax.f32 %v1061, 0.0
        %v1104 = vmax.f32 %v1066, 0.0
        %v1105 = vmax.f32 %v1069, 0.0
        %v1106 = vmax.f32 %v1074, 0.0
        %v1107 = vmax.f32 %v1077, 0.0
        %v1108 = vmax.f32 %v1082, 0.0
        %v1109 = vmax.f32 %v1085, 0.0
        %v1110 = vmax.f32 %v1090, 0.0
        %v1111 = vmax.f32 %v1093, 0.0
        %v1112 = vlaneseq
        %v1113 = vshrl.u32 %v1112, 7
        %v1114 = vsub.s32 1, %v1113
        %v1115 = vrot.slane %v858, %v1114
        %v1116 = vmul.f32 %v1096, %v1115
        %v1117 = vmul.f32 %v1097, %v1115
        %v1118 = vmul.f32 %v1098, %v1115
        %v1119 = vmul.f32 %v1099, %v1115
        %v1120 = vmul.f32 %v1100, %v1115
        %v1121 = vmul.f32 %v1101, %v1115
        %v1122 = vmul.f32 %v1102, %v1115
        %v1123 = vmul.f32 %v1103, %v1115
        %v1124 = vmul.f32 %v1104, %v1115
        %v1125 = vmul.f32 %v1105, %v1115
        %v1126 = vmul.f32 %v1106, %v1115
        %v1127 = vmul.f32 %v1107, %v1115
        %v1128 = vmul.f32 %v1108, %v1115
        %v1129 = vmul.f32 %v1109, %v1115
        %v1130 = vmul.f32 %v1110, %v1115
        %v1131 = vmul.f32 %v1111, %v1115
        %1132 = vadd.xlane.f32.xlu0 %v1116
        %v1133 = vpop.xlane.xlu0 %1132
        %1134 = vadd.xlane.f32.xlu0 %v1117
        %v1135 = vpop.xlane.xlu0 %1134
        %1136 = vadd.xlane.f32.xlu0 %v1118
        %v1137 = vpop.xlane.xlu0 %1136
        %1138 = vadd.xlane.f32.xlu0 %v1119
        %v1139 = vpop.xlane.xlu0 %1138
        %1140 = vadd.xlane.f32.xlu0 %v1120
        %v1141 = vpop.xlane.xlu0 %1140
        %1142 = vadd.xlane.f32.xlu0 %v1121
        %v1143 = vpop.xlane.xlu0 %1142
        %1144 = vadd.xlane.f32.xlu0 %v1122
        %v1145 = vpop.xlane.xlu0 %1144
        %1146 = vadd.xlane.f32.xlu0 %v1123
        %v1147 = vpop.xlane.xlu0 %1146
        %1148 = vadd.xlane.f32.xlu0 %v1124
        %v1149 = vpop.xlane.xlu0 %1148
        %1150 = vadd.xlane.f32.xlu0 %v1125
        %v1151 = vpop.xlane.xlu0 %1150
        %1152 = vadd.xlane.f32.xlu0 %v1126
        %v1153 = vpop.xlane.xlu0 %1152
        %1154 = vadd.xlane.f32.xlu0 %v1127
        %v1155 = vpop.xlane.xlu0 %1154
        %1156 = vadd.xlane.f32.xlu0 %v1128
        %v1157 = vpop.xlane.xlu0 %1156
        %1158 = vadd.xlane.f32.xlu0 %v1129
        %v1159 = vpop.xlane.xlu0 %1158
        %1160 = vadd.xlane.f32.xlu0 %v1130
        %v1161 = vpop.xlane.xlu0 %1160
        %1162 = vadd.xlane.f32.xlu0 %v1131
        %v1163 = vpop.xlane.xlu0 %1162
        %s1164 = sld [smem:[#allocation9 + $0x1]]
        %v1165 = vstv %s1164
        %v1166 = vadd.f32 %v1133, %v1165
        %v1167 = vadd.f32 %v1135, %v1165
        %v1168 = vadd.f32 %v1137, %v1165
        %v1169 = vadd.f32 %v1139, %v1165
        %v1170 = vadd.f32 %v1141, %v1165
        %v1171 = vadd.f32 %v1143, %v1165
        %v1172 = vadd.f32 %v1145, %v1165
        %v1173 = vadd.f32 %v1147, %v1165
        %v1174 = vadd.f32 %v1149, %v1165
        %v1175 = vadd.f32 %v1151, %v1165
        %v1176 = vadd.f32 %v1153, %v1165
        %v1177 = vadd.f32 %v1155, %v1165
        %v1178 = vadd.f32 %v1157, %v1165
        %v1179 = vadd.f32 %v1159, %v1165
        %v1180 = vadd.f32 %v1161, %v1165
        %v1181 = vadd.f32 %v1163, %v1165
        %v1198 = vlaneseq
        %v1199 = vand.u32 %v1198, 127
        %v1200 = vlaneseq
        %v1201 = vshrl.u32 %v1200, 7
        %v1202 = vsub.s32 %v1199, %v1201
        %v1203 = vrot.slane %v913, %v1202
        %v1204 = vadd.s32 %v1199, 4294967288
        %v1205 = vlaneseq
        %v1206 = vshrl.u32 %v1205, 7
        %v1207 = vsub.s32 %v1204, %v1206
        %v1208 = vrot.slane %v914, %v1207
        %vm1209 = vcmask 130112
        %v1210 = vsel %vm1209, %v1208, %v1203
        %v1211 = vadd.s32 %v1199, 4294967280
        %v1212 = vlaneseq
        %v1213 = vshrl.u32 %v1212, 7
        %v1214 = vsub.s32 %v1211, %v1213
        %v1215 = vrot.slane %v915, %v1214
        %vm1216 = vcmask 195712
        %v1217 = vsel %vm1216, %v1215, %v1210
        %v1218 = vadd.s32 %v1199, 4294967272
        %v1219 = vlaneseq
        %v1220 = vshrl.u32 %v1219, 7
        %v1221 = vsub.s32 %v1218, %v1220
        %v1222 = vrot.slane %v916, %v1221
        %vm1223 = vcmask 261312
        %v1224 = vsel %vm1223, %v1222, %v1217
        %v1225 = vadd.s32 %v1199, 4294967264
        %v1226 = vlaneseq
        %v1227 = vshrl.u32 %v1226, 7
        %v1228 = vsub.s32 %v1225, %v1227
        %v1229 = vrot.slane %v917, %v1228
        %vm1230 = vcmask 326912
        %v1231 = vsel %vm1230, %v1229, %v1224
        %v1232 = vadd.s32 %v1199, 4294967256
        %v1233 = vlaneseq
        %v1234 = vshrl.u32 %v1233, 7
        %v1235 = vsub.s32 %v1232, %v1234
        %v1236 = vrot.slane %v918, %v1235
        %vm1237 = vcmask 392512
        %v1238 = vsel %vm1237, %v1236, %v1231
        %v1239 = vadd.s32 %v1199, 4294967248
        %v1240 = vlaneseq
        %v1241 = vshrl.u32 %v1240, 7
        %v1242 = vsub.s32 %v1239, %v1241
        %v1243 = vrot.slane %v919, %v1242
        %vm1244 = vcmask 458112
        %v1245 = vsel %vm1244, %v1243, %v1238
        %v1246 = vadd.s32 %v1199, 4294967240
        %v1247 = vlaneseq
        %v1248 = vshrl.u32 %v1247, 7
        %v1249 = vsub.s32 %v1246, %v1248
        %v1250 = vrot.slane %v920, %v1249
        %vm1251 = vcmask 523712
        %v1252 = vsel %vm1251, %v1250, %v1245
        %v1253 = vadd.s32 %v1199, 4294967232
        %v1254 = vlaneseq
        %v1255 = vshrl.u32 %v1254, 7
        %v1256 = vsub.s32 %v1253, %v1255
        %v1257 = vrot.slane %v921, %v1256
        %vm1258 = vcmask 589312
        %v1259 = vsel %vm1258, %v1257, %v1252
        %v1260 = vadd.s32 %v1199, 4294967224
        %v1261 = vlaneseq
        %v1262 = vshrl.u32 %v1261, 7
        %v1263 = vsub.s32 %v1260, %v1262
        %v1264 = vrot.slane %v922, %v1263
        %vm1265 = vcmask 654912
        %v1266 = vsel %vm1265, %v1264, %v1259
        %v1267 = vadd.s32 %v1199, 4294967216
        %v1268 = vlaneseq
        %v1269 = vshrl.u32 %v1268, 7
        %v1270 = vsub.s32 %v1267, %v1269
        %v1271 = vrot.slane %v923, %v1270
        %vm1272 = vcmask 720512
        %v1273 = vsel %vm1272, %v1271, %v1266
        %v1274 = vadd.s32 %v1199, 4294967208
        %v1275 = vlaneseq
        %v1276 = vshrl.u32 %v1275, 7
        %v1277 = vsub.s32 %v1274, %v1276
        %v1278 = vrot.slane %v924, %v1277
        %vm1279 = vcmask 786112
        %v1280 = vsel %vm1279, %v1278, %v1273
        %v1281 = vadd.s32 %v1199, 4294967200
        %v1282 = vlaneseq
        %v1283 = vshrl.u32 %v1282, 7
        %v1284 = vsub.s32 %v1281, %v1283
        %v1285 = vrot.slane %v925, %v1284
        %vm1286 = vcmask 851712
        %v1287 = vsel %vm1286, %v1285, %v1280
        %v1288 = vadd.s32 %v1199, 4294967192
        %v1289 = vlaneseq
        %v1290 = vshrl.u32 %v1289, 7
        %v1291 = vsub.s32 %v1288, %v1290
        %v1292 = vrot.slane %v926, %v1291
        %vm1293 = vcmask 917312
        %v1294 = vsel %vm1293, %v1292, %v1287
        %v1295 = vadd.s32 %v1199, 4294967184
        %v1296 = vlaneseq
        %v1297 = vshrl.u32 %v1296, 7
        %v1298 = vsub.s32 %v1295, %v1297
        %v1299 = vrot.slane %v927, %v1298
        %vm1300 = vcmask 982912
        %v1301 = vsel %vm1300, %v1299, %v1294
        %v1302 = vadd.s32 %v1199, 4294967176
        %v1303 = vlaneseq
        %v1304 = vshrl.u32 %v1303, 7
        %v1305 = vsub.s32 %v1302, %v1304
        %v1306 = vrot.slane %v928, %v1305
        %vm1307 = vcmask 1048512
        %v1308 = vsel %vm1307, %v1306, %v1301
        %v1326 = vlaneseq
        %v1327 = vshrl.u32 %v1326, 7
        %v1328 = vsub.s32 %v1199, %v1327
        %v1329 = vrot.slane %v1166, %v1328
        %v1330 = vlaneseq
        %v1331 = vshrl.u32 %v1330, 7
        %v1332 = vsub.s32 %v1204, %v1331
        %v1333 = vrot.slane %v1167, %v1332
        %v1334 = vsel %vm1209, %v1333, %v1329
        %v1335 = vlaneseq
        %v1336 = vshrl.u32 %v1335, 7
        %v1337 = vsub.s32 %v1211, %v1336
        %v1338 = vrot.slane %v1168, %v1337
        %v1339 = vsel %vm1216, %v1338, %v1334
        %v1340 = vlaneseq
        %v1341 = vshrl.u32 %v1340, 7
        %v1342 = vsub.s32 %v1218, %v1341
        %v1343 = vrot.slane %v1169, %v1342
        %v1344 = vsel %vm1223, %v1343, %v1339
        %v1345 = vlaneseq
        %v1346 = vshrl.u32 %v1345, 7
        %v1347 = vsub.s32 %v1225, %v1346
        %v1348 = vrot.slane %v1170, %v1347
        %v1349 = vsel %vm1230, %v1348, %v1344
        %v1350 = vlaneseq
        %v1351 = vshrl.u32 %v1350, 7
        %v1352 = vsub.s32 %v1232, %v1351
        %v1353 = vrot.slane %v1171, %v1352
        %v1354 = vsel %vm1237, %v1353, %v1349
        %v1355 = vlaneseq
        %v1356 = vshrl.u32 %v1355, 7
        %v1357 = vsub.s32 %v1239, %v1356
        %v1358 = vrot.slane %v1172, %v1357
        %v1359 = vsel %vm1244, %v1358, %v1354
        %v1360 = vlaneseq
        %v1361 = vshrl.u32 %v1360, 7
        %v1362 = vsub.s32 %v1246, %v1361
        %v1363 = vrot.slane %v1173, %v1362
        %v1364 = vsel %vm1251, %v1363, %v1359
        %v1365 = vlaneseq
        %v1366 = vshrl.u32 %v1365, 7
        %v1367 = vsub.s32 %v1253, %v1366
        %v1368 = vrot.slane %v1174, %v1367
        %v1369 = vsel %vm1258, %v1368, %v1364
        %v1370 = vlaneseq
        %v1371 = vshrl.u32 %v1370, 7
        %v1372 = vsub.s32 %v1260, %v1371
        %v1373 = vrot.slane %v1175, %v1372
        %v1374 = vsel %vm1265, %v1373, %v1369
        %v1375 = vlaneseq
        %v1376 = vshrl.u32 %v1375, 7
        %v1377 = vsub.s32 %v1267, %v1376
        %v1378 = vrot.slane %v1176, %v1377
        %v1379 = vsel %vm1272, %v1378, %v1374
        %v1380 = vlaneseq
        %v1381 = vshrl.u32 %v1380, 7
        %v1382 = vsub.s32 %v1274, %v1381
        %v1383 = vrot.slane %v1177, %v1382
        %v1384 = vsel %vm1279, %v1383, %v1379
        %v1385 = vlaneseq
        %v1386 = vshrl.u32 %v1385, 7
        %v1387 = vsub.s32 %v1281, %v1386
        %v1388 = vrot.slane %v1178, %v1387
        %v1389 = vsel %vm1286, %v1388, %v1384
        %v1390 = vlaneseq
        %v1391 = vshrl.u32 %v1390, 7
        %v1392 = vsub.s32 %v1288, %v1391
        %v1393 = vrot.slane %v1179, %v1392
        %v1394 = vsel %vm1293, %v1393, %v1389
        %v1395 = vlaneseq
        %v1396 = vshrl.u32 %v1395, 7
        %v1397 = vsub.s32 %v1295, %v1396
        %v1398 = vrot.slane %v1180, %v1397
        %v1399 = vsel %vm1300, %v1398, %v1394
        %v1400 = vlaneseq
        %v1401 = vshrl.u32 %v1400, 7
        %v1402 = vsub.s32 %v1302, %v1401
        %v1403 = vrot.slane %v1181, %v1402
        %v1404 = vsel %vm1307, %v1403, %v1399
        %vm1406 = vcmask 1040384
        %v1407 = vsel %vm1406, %v1308, %v1404
        %1408 = vst [vmem:[%s339] sm:$0x3] %v1407
        %s1409 = sand.u32 %s186, 1
        %s1410 = scalar_lea.sflag [#allocation4], %s1409
        %s1411 = sand.u32 %s186, 1
        %s1412 = smul.addr %s1411, 2
        %s1413 = scalar_lea.vmem [#allocation10], %s1412
        // Predicated region
        $region65: #{tpu_custom_call.1} parent=47 // pred_check
          %p1414 = pneg %p196
        $region66: #{tpu_custom_call.1} parent=47 // pred_check_branch
          %1416 = sbr.rel (%p1414) target = $region68
        $region67: #{tpu_custom_call.1} parent=47 // pred_region
          %s1418 = ssub.s32 32, 32
          %1419 = vsyncadd %s1410, %s1418
          %s1420 = smul.addr %s26, 32
          %s1421 = scalar_lea.hbm %s7, %s1420
          %s1423 = sshll.u32 %s1413, 4
          %s1424 = int_to_ptr.vmem [resolvable:$true] %s1423
          %1426 = dma.vmem_to_hbm [thread:$0]  %s1424, 32, %s1421, %s1410
        $region68: #{tpu_custom_call.1} parent=47 // pred_fallthru
          _
      $region48: #{tpu_custom_call.1} parent=5 // pred_fallthru
        _
      %p1427 = scmp.le.s32.totalorder 2, %s21
      // Predicated region
      $region69: #{tpu_custom_call.1} parent=5 // pred_check
        %p1428 = pneg %p1427
      $region70: #{tpu_custom_call.1} parent=5 // pred_check_branch
        %1430 = sbr.rel (%p1428) target = $region72
      $region71: #{tpu_custom_call.1} parent=5 // pred_region
        %s1431 = ssub.s32 %s21, 2
        // Predicated region
        $region73: #{tpu_custom_call.1} parent=71 // pred_check
          %p1432 = pneg %p202
        $region74: #{tpu_custom_call.1} parent=71 // pred_check_branch
          %1434 = sbr.rel (%p1432) target = $region76
        $region75: #{tpu_custom_call.1} parent=71 // pred_region
          %s1435 = sand.u32 %s187, 1
          %s1436 = scalar_lea.sflag [#allocation4], %s1435
          %s1437 = sand.u32 %s187, 1
          %s1438 = smul.addr %s1437, 2
          %s1439 = scalar_lea.vmem [#allocation10], %s1438
          %1440 = dma.done %s1436, 32
        $region76: #{tpu_custom_call.1} parent=71 // pred_fallthru
          _
      $region72: #{tpu_custom_call.1} parent=5 // pred_fallthru
        _
    $region6: #{tpu_custom_call.1} parent=1 // loop_footer
      %s25 = sadd.s32 1, %s21
    $region7: #{tpu_custom_call.1} parent=1 // loop_footer_branch
      %20 = sbr.rel target = $region3
    $region8: #{tpu_custom_call.1} parent=1 // loop_exit
      _
    %1441 = vsyncpa [#allocation3], 1
    %s1442 = scalar_lea.sflag [#allocation3], 1
    %1443 = vsyncpa %s1442, 1
    %1444 = vsyncpa [#allocation7], 1
    %1445 = vsyncpa [#allocation4], 1
    %s1446 = scalar_lea.sflag [#allocation4], 1
    %1447 = vsyncpa %s1446, 1
    %1448 = vsyncpa [#allocation5], 1
    %s1449 = scalar_lea.sflag [#allocation5], 1
    %1450 = vsyncpa %s1449, 1

</llo_original>
